<compile_context>
chip_gen: v6e
topology: v6e:2x2x1
jax: 0.10.0
libtpu: 0.0.40
codegen_flags: <defaults>
</compile_context>

<pallas_src>
import jax
import jax.numpy as jnp
from jax import lax
from jax.experimental import pallas as pl
from jax.experimental.pallas import tpu as pltpu

LANE = 128  # lane width: channel / length padding granularity


def _round_up(v, m):
    return (v + m - 1) // m * m


def _make_resblock_kernel(K):
    half = K // 2

    def kernel(x_ref, valid_ref, w1_ref, b1_ref, w2_ref, b2_ref, o_ref):
        """x_ref/o_ref: (Cp, cols) f32.  valid_ref: (1, cols) f32.
        w*_ref: (Cp, K*Cp) MXU dtype (tap-major contraction).  b*_ref: (Cp, 1) f32."""
        x = x_ref[...]                                   # (Cp, cols) f32
        mxu_dtype = w1_ref.dtype

        def tap_stack(h):
            # h: (Cp, cols) in MXU dtype with zero columns wherever a conv
            # source is out of range, so the circular wrap pulls zeros
            # (== Conv1d zero padding / batch-element isolation).
            taps = [h if k == half else jnp.roll(h, half - k, axis=1)
                    for k in range(K)]
            return jnp.concatenate(taps, axis=0)         # (K*Cp, cols)

        # conv1: relu -> single bf16 cast -> one wide-contraction MXU matmul.
        h1 = jnp.maximum(x, 0.0).astype(mxu_dtype)
        y1 = jnp.dot(w1_ref[...], tap_stack(h1),
                     preferred_element_type=jnp.float32) + b1_ref[...]
        # conv2: re-zero padding columns once (bias / conv spill contaminated
        # them) so the shifts keep pulling zeros, then same fused matmul.
        h2 = (jnp.maximum(y1, 0.0) * valid_ref[...]).astype(mxu_dtype)
        y2 = jnp.dot(w2_ref[...], tap_stack(h2),
                     preferred_element_type=jnp.float32) + b2_ref[...]
        o_ref[...] = x + jnp.float32(0.3) * y2           # residual (f32)

    return kernel


def _pick_nb(N, L_pad, Cp, K):
    # Rough per-lane-column VMEM cost: x & out tiles f32 double-buffered,
    # bf16 tap stack, a handful of live f32 temporaries.
    per_col = Cp * (2 * 4 + 2 * 4 + K * 2 + 6 * 4)
    budget = 24 * 1024 * 1024
    target_cols = max(LANE, min(4096, (budget // per_col) // LANE * LANE))
    return max(1, min(N, target_cols // L_pad))


def _vmem_limit_bytes(Cp, K, cols):
    w_bytes = 2 * (Cp * K * Cp * 2) * 2          # two bf16 weight sets, 2x buffered
    io_bytes = 2 * (Cp * cols * 4) * 2           # x + out tiles, f32, 2x buffered
    tmp_bytes = Cp * cols * (K * 2 + 8 * 4)      # bf16 tap stack + f32 temporaries
    est = int(1.3 * (w_bytes + io_bytes + tmp_bytes)) + (2 << 20)
    try:
        cap = int(pltpu.get_tpu_info().vmem_capacity_bytes)
    except Exception:
        cap = 64 * 1024 * 1024                   # conservative (v7x physical VMEM)
    return max(32 * 1024 * 1024, min(int(0.9 * cap), est))


def resblock_pallas(x, w1, b1, w2, b2, *, mxu_dtype=jnp.bfloat16):
    """x: (N, C, L) f32; w*: (C, C, K) PyTorch Conv1d layout; b*: (C,)."""
    assert x.ndim == 3
    x = x.astype(jnp.float32)
    N, C, L = x.shape
    K = w1.shape[-1]
    half = K // 2

    Cp = _round_up(C, LANE)                      # MXU-aligned channel dim
    L_pad = _round_up(L + half, LANE)            # >= K//2 trailing zero cols / element
    NB = _pick_nb(N, L_pad, Cp, K)               # batch elems folded per grid step
    n_blocks = -(-N // NB)
    N_pad = n_blocks * NB
    cols = NB * L_pad                            # lane columns per grid step

    # ---- glue (plain JAX): pad, fold batch into the lane axis ----------------
    xp = jnp.pad(x, ((0, N_pad - N), (0, Cp - C), (0, L_pad - L)))
    xf = jnp.transpose(xp, (1, 0, 2)).reshape(Cp, N_pad * L_pad)

    # (1, cols) validity mask: column c is a real sequence position iff
    # (c mod L_pad) < L.  Same pattern for every grid step.
    valid = ((jnp.arange(cols, dtype=jnp.int32) % L_pad) < L)
    valid = valid.astype(jnp.float32).reshape(1, cols)

    def prep_w(w):
        # (Cout, Cin, K) -> (Cp, K*Cp) with tap-major blocks along the
        # contraction axis: fused[o, k*Cp + i] = w[o, i, k].
        wp = jnp.pad(w, ((0, Cp - C), (0, Cp - C), (0, 0)))
        return jnp.transpose(wp, (0, 2, 1)).reshape(Cp, K * Cp).astype(mxu_dtype)

    w1f, w2f = prep_w(w1), prep_w(w2)
    b1c = jnp.pad(b1, (0, Cp - C)).astype(jnp.float32).reshape(Cp, 1)
    b2c = jnp.pad(b2, (0, Cp - C)).astype(jnp.float32).reshape(Cp, 1)

    out_f = pl.pallas_call(
        _make_resblock_kernel(K),
        out_shape=jax.ShapeDtypeStruct((Cp, N_pad * L_pad), jnp.float32),
        grid_spec=pltpu.PrefetchScalarGridSpec(
            num_scalar_prefetch=0,
            grid=(n_blocks,),
            in_specs=[
                pl.BlockSpec((Cp, cols), lambda i: (0, i)),      # x (batch-folded)
                pl.BlockSpec((1, cols), lambda i: (0, 0)),       # validity mask
                pl.BlockSpec((Cp, K * Cp), lambda i: (0, 0)),    # conv1 fused weights
                pl.BlockSpec((Cp, 1), lambda i: (0, 0)),         # conv1 bias
                pl.BlockSpec((Cp, K * Cp), lambda i: (0, 0)),    # conv2 fused weights
                pl.BlockSpec((Cp, 1), lambda i: (0, 0)),         # conv2 bias
            ],
            out_specs=pl.BlockSpec((Cp, cols), lambda i: (0, i)),
        ),
        compiler_params=pltpu.CompilerParams(
            dimension_semantics=("parallel",),
            vmem_limit_bytes=_vmem_limit_bytes(Cp, K, cols)),
    )(xf, valid, w1f, b1c, w2f, b2c)

    # ---- unfold + strip padding ----------------------------------------------
    out = jnp.transpose(out_f.reshape(Cp, N_pad, L_pad), (1, 0, 2))
    return out[:N, :C, :L]


def resblock_ref(x, w1, b1, w2, b2):
    """Plain-JAX f32 reference matching nn.Conv1d(k=5, pad=2) semantics (NCL)."""
    def conv1d(h, w, b):
        y = lax.conv_general_dilated(
            h, w, window_strides=(1,), padding=((2, 2),),
            dimension_numbers=("NCH", "OIH", "NCH"))
        return y + b[None, :, None]
    h = jnp.maximum(x, 0.0)
    h = conv1d(h, w1, b1)
    h = jnp.maximum(h, 0.0)
    h = conv1d(h, w2, b2)
    return x + 0.3 * h


if __name__ == "__main__":
    N, C, L, K = 2, 4, 16, 5   # batch, nhid, seq length, kernel size

    key = jax.random.PRNGKey(0)
    kx, kw1, kb1, kw2, kb2 = jax.random.split(key, 5)

    x = jax.random.normal(kx, (N, C, L), dtype=jnp.float32)
    # PyTorch Conv1d default init: U(-s, s), s = 1/sqrt(Cin*K).
    s = 1.0 / jnp.sqrt(jnp.float32(C * K))
    w1 = jax.random.uniform(kw1, (C, C, K), jnp.float32, -s, s)
    b1 = jax.random.uniform(kb1, (C,), jnp.float32, -s, s)
    w2 = jax.random.uniform(kw2, (C, C, K), jnp.float32, -s, s)
    b2 = jax.random.uniform(kb2, (C,), jnp.float32, -s, s)

    out = jax.block_until_ready(resblock_pallas(x, w1, b1, w2, b2))
    ref = resblock_ref(x, w1, b1, w2, b2)

    assert out.shape == (N, C, L)
    # bf16 MXU path: compare against the f32 reference at bf16-level tolerance.
    err = float(jnp.max(jnp.abs(out - ref)))
    assert jnp.allclose(out, ref, atol=2e-2, rtol=2e-2), (
        "mismatch vs reference; max abs diff = %e" % err)

    print("KERNEL_OK")
</pallas_src>

<mosaic_0001>
module attributes {stable_mosaic.version = 11 : i64} {
  func.func @kernel(%arg0: i32, %arg1: memref<128x256xf32, #tpu.memory_space<vmem>>, %arg2: memref<1x256xf32, #tpu.memory_space<vmem>>, %arg3: memref<128x640xbf16, #tpu.memory_space<vmem>>, %arg4: memref<128x1xf32, #tpu.memory_space<vmem>>, %arg5: memref<128x640xbf16, #tpu.memory_space<vmem>>, %arg6: memref<128x1xf32, #tpu.memory_space<vmem>>, %arg7: memref<128x256xf32, #tpu.memory_space<vmem>>) attributes {dimension_semantics = [#tpu.dimension_semantics<parallel>], iteration_bounds = array<i64: 1>, scalar_prefetch = 0 : i64, scratch_operands = 0 : i64, tpu.core_type = #tpu.core_type<tc>, window_params = [{transform_indices = @transform_0, window_bounds = array<i64: 128, 256>}, {pipeline_mode = #tpu.pipeline_mode<synchronous>, transform_indices = @transform_1, window_bounds = array<i64: 1, 256>}, {pipeline_mode = #tpu.pipeline_mode<synchronous>, transform_indices = @transform_2, window_bounds = array<i64: 128, 640>}, {pipeline_mode = #tpu.pipeline_mode<synchronous>, transform_indices = @transform_3, window_bounds = array<i64: 128, 1>}, {pipeline_mode = #tpu.pipeline_mode<synchronous>, transform_indices = @transform_4, window_bounds = array<i64: 128, 640>}, {pipeline_mode = #tpu.pipeline_mode<synchronous>, transform_indices = @transform_5, window_bounds = array<i64: 128, 1>}, {transform_indices = @transform_6, window_bounds = array<i64: 128, 256>}]} {
    %c0 = arith.constant 0 : index
    %c0_0 = arith.constant 0 : index
    %0 = vector.load %arg1[%c0, %c0_0] : memref<128x256xf32, #tpu.memory_space<vmem>>, vector<128x256xf32>
    %cst = arith.constant 0.000000e+00 : f32
    %1 = vector.broadcast %cst : f32 to vector<128x256xf32>
    %2 = arith.maximumf %0, %1 : vector<128x256xf32>
    %3 = arith.truncf %2 : vector<128x256xf32> to vector<128x256xbf16>
    %c0_1 = arith.constant 0 : index
    %c0_2 = arith.constant 0 : index
    %4 = vector.load %arg3[%c0_1, %c0_2] : memref<128x640xbf16, #tpu.memory_space<vmem>>, vector<128x640xbf16>
    %5 = vector.extract_strided_slice %3 {offsets = [0, 254], sizes = [128, 2], strides = [1, 1]} : vector<128x256xbf16> to vector<128x2xbf16>
    %6 = vector.extract_strided_slice %3 {offsets = [0, 0], sizes = [128, 254], strides = [1, 1]} : vector<128x256xbf16> to vector<128x254xbf16>
    %7 = tpu.concatenate %5, %6 in 1 : vector<128x2xbf16>, vector<128x254xbf16> -> vector<128x256xbf16>
    %8 = vector.extract_strided_slice %3 {offsets = [0, 255], sizes = [128, 1], strides = [1, 1]} : vector<128x256xbf16> to vector<128x1xbf16>
    %9 = vector.extract_strided_slice %3 {offsets = [0, 0], sizes = [128, 255], strides = [1, 1]} : vector<128x256xbf16> to vector<128x255xbf16>
    %10 = tpu.concatenate %8, %9 in 1 : vector<128x1xbf16>, vector<128x255xbf16> -> vector<128x256xbf16>
    %11 = vector.extract_strided_slice %3 {offsets = [0, 1], sizes = [128, 255], strides = [1, 1]} : vector<128x256xbf16> to vector<128x255xbf16>
    %12 = vector.extract_strided_slice %3 {offsets = [0, 0], sizes = [128, 1], strides = [1, 1]} : vector<128x256xbf16> to vector<128x1xbf16>
    %13 = tpu.concatenate %11, %12 in 1 : vector<128x255xbf16>, vector<128x1xbf16> -> vector<128x256xbf16>
    %14 = vector.extract_strided_slice %3 {offsets = [0, 2], sizes = [128, 254], strides = [1, 1]} : vector<128x256xbf16> to vector<128x254xbf16>
    %15 = vector.extract_strided_slice %3 {offsets = [0, 0], sizes = [128, 2], strides = [1, 1]} : vector<128x256xbf16> to vector<128x2xbf16>
    %16 = tpu.concatenate %14, %15 in 1 : vector<128x254xbf16>, vector<128x2xbf16> -> vector<128x256xbf16>
    %17 = tpu.concatenate %7, %10, %3, %13, %16 in 0 : vector<128x256xbf16>, vector<128x256xbf16>, vector<128x256xbf16>, vector<128x256xbf16>, vector<128x256xbf16> -> vector<640x256xbf16>
    %cst_3 = arith.constant dense<0.000000e+00> : vector<128x256xf32>
    %18 = tpu.matmul %4, %17, %cst_3 {dimension_numbers = #tpu.dot_dimension_numbers<[1], [0], [0], [1], [0, 0, 1, 1], [], []>} : vector<128x640xbf16>, vector<640x256xbf16>, vector<128x256xf32> -> vector<128x256xf32>
    %c0_4 = arith.constant 0 : index
    %c0_5 = arith.constant 0 : index
    %19 = vector.load %arg4[%c0_4, %c0_5] : memref<128x1xf32, #tpu.memory_space<vmem>>, vector<128x1xf32>
    %20 = vector.broadcast %19 : vector<128x1xf32> to vector<128x256xf32>
    %21 = arith.addf %18, %20 : vector<128x256xf32>
    %cst_6 = arith.constant 0.000000e+00 : f32
    %22 = vector.broadcast %cst_6 : f32 to vector<128x256xf32>
    %23 = arith.maximumf %21, %22 : vector<128x256xf32>
    %c0_7 = arith.constant 0 : index
    %c0_8 = arith.constant 0 : index
    %24 = vector.load %arg2[%c0_7, %c0_8] : memref<1x256xf32, #tpu.memory_space<vmem>>, vector<1x256xf32>
    %25 = vector.broadcast %24 : vector<1x256xf32> to vector<128x256xf32>
    %26 = arith.mulf %23, %25 : vector<128x256xf32>
    %27 = arith.truncf %26 : vector<128x256xf32> to vector<128x256xbf16>
    %c0_9 = arith.constant 0 : index
    %c0_10 = arith.constant 0 : index
    %28 = vector.load %arg5[%c0_9, %c0_10] : memref<128x640xbf16, #tpu.memory_space<vmem>>, vector<128x640xbf16>
    %29 = vector.extract_strided_slice %27 {offsets = [0, 254], sizes = [128, 2], strides = [1, 1]} : vector<128x256xbf16> to vector<128x2xbf16>
    %30 = vector.extract_strided_slice %27 {offsets = [0, 0], sizes = [128, 254], strides = [1, 1]} : vector<128x256xbf16> to vector<128x254xbf16>
    %31 = tpu.concatenate %29, %30 in 1 : vector<128x2xbf16>, vector<128x254xbf16> -> vector<128x256xbf16>
    %32 = vector.extract_strided_slice %27 {offsets = [0, 255], sizes = [128, 1], strides = [1, 1]} : vector<128x256xbf16> to vector<128x1xbf16>
    %33 = vector.extract_strided_slice %27 {offsets = [0, 0], sizes = [128, 255], strides = [1, 1]} : vector<128x256xbf16> to vector<128x255xbf16>
    %34 = tpu.concatenate %32, %33 in 1 : vector<128x1xbf16>, vector<128x255xbf16> -> vector<128x256xbf16>
    %35 = vector.extract_strided_slice %27 {offsets = [0, 1], sizes = [128, 255], strides = [1, 1]} : vector<128x256xbf16> to vector<128x255xbf16>
    %36 = vector.extract_strided_slice %27 {offsets = [0, 0], sizes = [128, 1], strides = [1, 1]} : vector<128x256xbf16> to vector<128x1xbf16>
    %37 = tpu.concatenate %35, %36 in 1 : vector<128x255xbf16>, vector<128x1xbf16> -> vector<128x256xbf16>
    %38 = vector.extract_strided_slice %27 {offsets = [0, 2], sizes = [128, 254], strides = [1, 1]} : vector<128x256xbf16> to vector<128x254xbf16>
    %39 = vector.extract_strided_slice %27 {offsets = [0, 0], sizes = [128, 2], strides = [1, 1]} : vector<128x256xbf16> to vector<128x2xbf16>
    %40 = tpu.concatenate %38, %39 in 1 : vector<128x254xbf16>, vector<128x2xbf16> -> vector<128x256xbf16>
    %41 = tpu.concatenate %31, %34, %27, %37, %40 in 0 : vector<128x256xbf16>, vector<128x256xbf16>, vector<128x256xbf16>, vector<128x256xbf16>, vector<128x256xbf16> -> vector<640x256xbf16>
    %cst_11 = arith.constant dense<0.000000e+00> : vector<128x256xf32>
    %42 = tpu.matmul %28, %41, %cst_11 {dimension_numbers = #tpu.dot_dimension_numbers<[1], [0], [0], [1], [0, 0, 1, 1], [], []>} : vector<128x640xbf16>, vector<640x256xbf16>, vector<128x256xf32> -> vector<128x256xf32>
    %c0_12 = arith.constant 0 : index
    %c0_13 = arith.constant 0 : index
    %43 = vector.load %arg6[%c0_12, %c0_13] : memref<128x1xf32, #tpu.memory_space<vmem>>, vector<128x1xf32>
    %44 = vector.broadcast %43 : vector<128x1xf32> to vector<128x256xf32>
    %45 = arith.addf %42, %44 : vector<128x256xf32>
    %cst_14 = arith.constant 3.000000e-01 : f32
    %46 = vector.broadcast %cst_14 : f32 to vector<128x256xf32>
    %47 = arith.mulf %46, %45 : vector<128x256xf32>
    %48 = arith.addf %0, %47 : vector<128x256xf32>
    %c0_15 = arith.constant 0 : index
    %c0_16 = arith.constant 0 : index
    %49 = vector.load %arg7[%c0_15, %c0_16] : memref<128x256xf32, #tpu.memory_space<vmem>>, vector<128x256xf32>
    tpu.vector_store %arg7[%c0_15, %c0_16], %48 {strides = array<i32>} : memref<128x256xf32, #tpu.memory_space<vmem>>, vector<128x256xf32>,
    return
  }
  func.func @transform_0(%arg0: i32) -> (i32, i32) {
    %c0_i32 = arith.constant 0 : i32
    %c0_i32_0 = arith.constant 0 : i32
    return %c0_i32, %arg0 : i32, i32
  }
  func.func @transform_1(%arg0: i32) -> (i32, i32) {
    %c0_i32 = arith.constant 0 : i32
    %c0_i32_0 = arith.constant 0 : i32
    %c0_i32_1 = arith.constant 0 : i32
    return %c0_i32, %c0_i32_0 : i32, i32
  }
  func.func @transform_2(%arg0: i32) -> (i32, i32) {
    %c0_i32 = arith.constant 0 : i32
    %c0_i32_0 = arith.constant 0 : i32
    %c0_i32_1 = arith.constant 0 : i32
    return %c0_i32, %c0_i32_0 : i32, i32
  }
  func.func @transform_3(%arg0: i32) -> (i32, i32) {
    %c0_i32 = arith.constant 0 : i32
    %c0_i32_0 = arith.constant 0 : i32
    %c0_i32_1 = arith.constant 0 : i32
    return %c0_i32, %c0_i32_0 : i32, i32
  }
  func.func @transform_4(%arg0: i32) -> (i32, i32) {
    %c0_i32 = arith.constant 0 : i32
    %c0_i32_0 = arith.constant 0 : i32
    %c0_i32_1 = arith.constant 0 : i32
    return %c0_i32, %c0_i32_0 : i32, i32
  }
  func.func @transform_5(%arg0: i32) -> (i32, i32) {
    %c0_i32 = arith.constant 0 : i32
    %c0_i32_0 = arith.constant 0 : i32
    %c0_i32_1 = arith.constant 0 : i32
    return %c0_i32, %c0_i32_0 : i32, i32
  }
  func.func @transform_6(%arg0: i32) -> (i32, i32) {
    %c0_i32 = arith.constant 0 : i32
    %c0_i32_0 = arith.constant 0 : i32
    return %c0_i32, %arg0 : i32, i32
  }
}

</mosaic_0001>

<llo_original>
// kernel: tpu_custom_call.1
$region0: #{tpu_custom_call.1}
  #allocation0 [shape = 'u32[]', space=smem, size = 0x4, offset = 0x4, fixed_abs, tag = 'smem constant byte address 0x4 - core index']
  #allocation1 [shape = 'u32[144,128]{1,0:T(1,128)}', space=vmem, size = 0x12000, scoped, tag = 'internal scratch']
  %s0 = inlined_call_operand.vmem [shape: f32[128,256], index: 0, kind: input, shape index: {}]
  %s1 = inlined_call_operand.hbm [shape: f32[1,256], index: 1, kind: input, shape index: {}]
  %s2 = inlined_call_operand.hbm [shape: bf16[128,640], index: 2, kind: input, shape index: {}]
  %s3 = inlined_call_operand.vmem [shape: f32[128,1], index: 3, kind: input, shape index: {}]
  %s4 = inlined_call_operand.hbm [shape: bf16[128,640], index: 4, kind: input, shape index: {}]
  %s5 = inlined_call_operand.vmem [shape: f32[128,1], index: 5, kind: input, shape index: {}]
  %s6 = inlined_call_operand.hbm [shape: f32[128,256], index: 6, kind: output, shape index: {}]
  %s7 = sld [smem:[#allocation0]]
  $region46: #{tpu_custom_call.1} parent=0
    _
  %s9 = ssub.s32 1, %s7
  %s10 = scalar_select 0, %s9, %s7
  $region1: #{tpu_custom_call.1} parent=0
    #allocation2 [shape = 'u8[1024]{0}', space=vmem, size = 0x400, scoped, tag = 'input window, operand 1, single buffered']
    #allocation3 [shape = 's32[1]{0}', space=sflag, size = 0x4, scoped, tag = 'scoped memory for tpu_custom_call.1']
    #allocation4 [shape = 's32[1]{0}', space=sflag, size = 0x4, scoped, tag = 'scoped memory for tpu_custom_call.1']
    #allocation5 [shape = 'u8[163840]{0}', space=vmem, size = 0x28000, scoped, tag = 'input window, operand 2, single buffered']
    #allocation6 [shape = 's32[1]{0}', space=sflag, size = 0x4, scoped, tag = 'scoped memory for tpu_custom_call.1']
    #allocation7 [shape = 'u8[163840]{0}', space=vmem, size = 0x28000, scoped, tag = 'input window, operand 4, single buffered']
    #allocation8 [shape = 'u8[131072]{0}', space=vmem, size = 0x20000, scoped, tag = 'output window, operand 0, single buffered']
    %11 = vsyncpa [#allocation3], 0
    %12 = vsyncpa [#allocation6], 0
    %13 = vsyncpa [#allocation4], 0
    // Predicated region
    $region2: #{tpu_custom_call.1} parent=1 // pred_check
      _
    $region3: #{tpu_custom_call.1} parent=1 // pred_check_branch
      %15 = sbr.rel (0) target = $region5
    $region4: #{tpu_custom_call.1} parent=1 // pred_region
      _
    $region5: #{tpu_custom_call.1} parent=1 // pred_fallthru
      _
    // Predicated region
    $region6: #{tpu_custom_call.1} parent=1 // pred_check
      _
    $region7: #{tpu_custom_call.1} parent=1 // pred_check_branch
      %17 = sbr.rel (0) target = $region9
    $region8: #{tpu_custom_call.1} parent=1 // pred_region
      %s19 = ssub.s32 32, 32
      %20 = vsyncadd [#allocation3], %s19
      %s22 = sshll.u32 [#allocation2], 4
      %s23 = int_to_ptr.vmem [resolvable:$true] %s22
      %25 = dma.hbm_to_vmem [thread:$0]  %s1, 32, %s23, [#allocation3]
    $region9: #{tpu_custom_call.1} parent=1 // pred_fallthru
      _
    // Predicated region
    $region10: #{tpu_custom_call.1} parent=1 // pred_check
      _
    $region11: #{tpu_custom_call.1} parent=1 // pred_check_branch
      %27 = sbr.rel (0) target = $region13
    $region12: #{tpu_custom_call.1} parent=1 // pred_region
      %s29 = ssub.s32 5120, 5120
      %30 = vsyncadd [#allocation6], %s29
      %s31 = sshll.u32 [#allocation5], 4
      %s32 = int_to_ptr.vmem [resolvable:$true] %s31
      %37 = dma.hbm_to_vmem [thread:$0]  %s2, 5120, %s32, [#allocation6], 320, 320, 20
    $region13: #{tpu_custom_call.1} parent=1 // pred_fallthru
      _
    // Predicated region
    $region14: #{tpu_custom_call.1} parent=1 // pred_check
      _
    $region15: #{tpu_custom_call.1} parent=1 // pred_check_branch
      %39 = sbr.rel (0) target = $region17
    $region16: #{tpu_custom_call.1} parent=1 // pred_region
      _
    $region17: #{tpu_custom_call.1} parent=1 // pred_fallthru
      _
    // Predicated region
    $region18: #{tpu_custom_call.1} parent=1 // pred_check
      _
    $region19: #{tpu_custom_call.1} parent=1 // pred_check_branch
      %41 = sbr.rel (0) target = $region21
    $region20: #{tpu_custom_call.1} parent=1 // pred_region
      %s43 = ssub.s32 5120, 5120
      %44 = vsyncadd [#allocation6], %s43
      %s45 = sshll.u32 [#allocation7], 4
      %s46 = int_to_ptr.vmem [resolvable:$true] %s45
      %51 = dma.hbm_to_vmem [thread:$0]  %s4, 5120, %s46, [#allocation6], 320, 320, 20
    $region21: #{tpu_custom_call.1} parent=1 // pred_fallthru
      _
    // Predicated region
    $region22: #{tpu_custom_call.1} parent=1 // pred_check
      _
    $region23: #{tpu_custom_call.1} parent=1 // pred_check_branch
      %53 = sbr.rel (0) target = $region25
    $region24: #{tpu_custom_call.1} parent=1 // pred_region
      _
    $region25: #{tpu_custom_call.1} parent=1 // pred_fallthru
      _
    // Predicated region
    $region26: #{tpu_custom_call.1} parent=1 // pred_check
      _
    $region27: #{tpu_custom_call.1} parent=1 // pred_check_branch
      %55 = sbr.rel (0) target = $region29
    $region28: #{tpu_custom_call.1} parent=1 // pred_region
      %56 = dma.done [#allocation3], 32
    $region29: #{tpu_custom_call.1} parent=1 // pred_fallthru
      _
    // Predicated region
    $region30: #{tpu_custom_call.1} parent=1 // pred_check
      _
    $region31: #{tpu_custom_call.1} parent=1 // pred_check_branch
      %58 = sbr.rel (0) target = $region33
    $region32: #{tpu_custom_call.1} parent=1 // pred_region
      %59 = dma.done [#allocation6], 5120
    $region33: #{tpu_custom_call.1} parent=1 // pred_fallthru
      _
    // Predicated region
    $region34: #{tpu_custom_call.1} parent=1 // pred_check
      _
    $region35: #{tpu_custom_call.1} parent=1 // pred_check_branch
      %61 = sbr.rel (0) target = $region37
    $region36: #{tpu_custom_call.1} parent=1 // pred_region
      %62 = dma.done [#allocation6], 5120
    $region37: #{tpu_custom_call.1} parent=1 // pred_fallthru
      _
    %v64 = vld [vmem:[%s0] sm:$0xff]
    %v65 = vld [vmem:[%s0 + $0x8] sm:$0xff]
    %v66 = vld [vmem:[%s0 + $0x10] sm:$0xff]
    %v67 = vld [vmem:[%s0 + $0x18] sm:$0xff]
    %v68 = vld [vmem:[%s0 + $0x20] sm:$0xff]
    %v69 = vld [vmem:[%s0 + $0x28] sm:$0xff]
    %v70 = vld [vmem:[%s0 + $0x30] sm:$0xff]
    %v71 = vld [vmem:[%s0 + $0x38] sm:$0xff]
    %v72 = vld [vmem:[%s0 + $0x40] sm:$0xff]
    %v73 = vld [vmem:[%s0 + $0x48] sm:$0xff]
    %v74 = vld [vmem:[%s0 + $0x50] sm:$0xff]
    %v75 = vld [vmem:[%s0 + $0x58] sm:$0xff]
    %v76 = vld [vmem:[%s0 + $0x60] sm:$0xff]
    %v77 = vld [vmem:[%s0 + $0x68] sm:$0xff]
    %v78 = vld [vmem:[%s0 + $0x70] sm:$0xff]
    %v79 = vld [vmem:[%s0 + $0x78] sm:$0xff]
    %v80 = vld [vmem:[%s0 + $0x80] sm:$0xff]
    %v81 = vld [vmem:[%s0 + $0x88] sm:$0xff]
    %v82 = vld [vmem:[%s0 + $0x90] sm:$0xff]
    %v83 = vld [vmem:[%s0 + $0x98] sm:$0xff]
    %v84 = vld [vmem:[%s0 + $0xa0] sm:$0xff]
    %v85 = vld [vmem:[%s0 + $0xa8] sm:$0xff]
    %v86 = vld [vmem:[%s0 + $0xb0] sm:$0xff]
    %v87 = vld [vmem:[%s0 + $0xb8] sm:$0xff]
    %v88 = vld [vmem:[%s0 + $0xc0] sm:$0xff]
    %v89 = vld [vmem:[%s0 + $0xc8] sm:$0xff]
    %v90 = vld [vmem:[%s0 + $0xd0] sm:$0xff]
    %v91 = vld [vmem:[%s0 + $0xd8] sm:$0xff]
    %v92 = vld [vmem:[%s0 + $0xe0] sm:$0xff]
    %v93 = vld [vmem:[%s0 + $0xe8] sm:$0xff]
    %v94 = vld [vmem:[%s0 + $0xf0] sm:$0xff]
    %v95 = vld [vmem:[%s0 + $0xf8] sm:$0xff]
    %v96 = vmax.f32 %v64, 0.0
    %v97 = vmax.f32 %v65, 0.0
    %v98 = vmax.f32 %v66, 0.0
    %v99 = vmax.f32 %v67, 0.0
    %v100 = vmax.f32 %v68, 0.0
    %v101 = vmax.f32 %v69, 0.0
    %v102 = vmax.f32 %v70, 0.0
    %v103 = vmax.f32 %v71, 0.0
    %v104 = vmax.f32 %v72, 0.0
    %v105 = vmax.f32 %v73, 0.0
    %v106 = vmax.f32 %v74, 0.0
    %v107 = vmax.f32 %v75, 0.0
    %v108 = vmax.f32 %v76, 0.0
    %v109 = vmax.f32 %v77, 0.0
    %v110 = vmax.f32 %v78, 0.0
    %v111 = vmax.f32 %v79, 0.0
    %v112 = vmax.f32 %v80, 0.0
    %v113 = vmax.f32 %v81, 0.0
    %v114 = vmax.f32 %v82, 0.0
    %v115 = vmax.f32 %v83, 0.0
    %v116 = vmax.f32 %v84, 0.0
    %v117 = vmax.f32 %v85, 0.0
    %v118 = vmax.f32 %v86, 0.0
    %v119 = vmax.f32 %v87, 0.0
    %v120 = vmax.f32 %v88, 0.0
    %v121 = vmax.f32 %v89, 0.0
    %v122 = vmax.f32 %v90, 0.0
    %v123 = vmax.f32 %v91, 0.0
    %v124 = vmax.f32 %v92, 0.0
    %v125 = vmax.f32 %v93, 0.0
    %v126 = vmax.f32 %v94, 0.0
    %v127 = vmax.f32 %v95, 0.0
    %v128 = vpack.c.bf16 %v98, %v96
    %v129 = vpack.c.bf16 %v99, %v97
    %v130 = vpack.c.bf16 %v102, %v100
    %v131 = vpack.c.bf16 %v103, %v101
    %v132 = vpack.c.bf16 %v106, %v104
    %v133 = vpack.c.bf16 %v107, %v105
    %v134 = vpack.c.bf16 %v110, %v108
    %v135 = vpack.c.bf16 %v111, %v109
    %v136 = vpack.c.bf16 %v114, %v112
    %v137 = vpack.c.bf16 %v115, %v113
    %v138 = vpack.c.bf16 %v118, %v116
    %v139 = vpack.c.bf16 %v119, %v117
    %v140 = vpack.c.bf16 %v122, %v120
    %v141 = vpack.c.bf16 %v123, %v121
    %v142 = vpack.c.bf16 %v126, %v124
    %v143 = vpack.c.bf16 %v127, %v125
    %v144 = vld [vmem:[#allocation5] sm:$0xff]
    %v145 = vld [vmem:[#allocation5 + $0x8] sm:$0xff]
    %v146 = vld [vmem:[#allocation5 + $0x10] sm:$0xf]
    %v147 = vld [vmem:[#allocation5 + $0x14] sm:$0xff]
    %v148 = vld [vmem:[#allocation5 + $0x1c] sm:$0xff]
    %v149 = vld [vmem:[#allocation5 + $0x24] sm:$0xf]
    %v150 = vld [vmem:[#allocation5 + $0x28] sm:$0xff]
    %v151 = vld [vmem:[#allocation5 + $0x30] sm:$0xff]
    %v152 = vld [vmem:[#allocation5 + $0x38] sm:$0xf]
    %v153 = vld [vmem:[#allocation5 + $0x3c] sm:$0xff]
    %v154 = vld [vmem:[#allocation5 + $0x44] sm:$0xff]
    %v155 = vld [vmem:[#allocation5 + $0x4c] sm:$0xf]
    %v156 = vld [vmem:[#allocation5 + $0x50] sm:$0xff]
    %v157 = vld [vmem:[#allocation5 + $0x58] sm:$0xff]
    %v158 = vld [vmem:[#allocation5 + $0x60] sm:$0xf]
    %v159 = vld [vmem:[#allocation5 + $0x64] sm:$0xff]
    %v160 = vld [vmem:[#allocation5 + $0x6c] sm:$0xff]
    %v161 = vld [vmem:[#allocation5 + $0x74] sm:$0xf]
    %v162 = vld [vmem:[#allocation5 + $0x78] sm:$0xff]
    %v163 = vld [vmem:[#allocation5 + $0x80] sm:$0xff]
    %v164 = vld [vmem:[#allocation5 + $0x88] sm:$0xf]
    %v165 = vld [vmem:[#allocation5 + $0x8c] sm:$0xff]
    %v166 = vld [vmem:[#allocation5 + $0x94] sm:$0xff]
    %v167 = vld [vmem:[#allocation5 + $0x9c] sm:$0xf]
    %v168 = vld [vmem:[#allocation5 + $0xa0] sm:$0xff]
    %v169 = vld [vmem:[#allocation5 + $0xa8] sm:$0xff]
    %v170 = vld [vmem:[#allocation5 + $0xb0] sm:$0xf]
    %v171 = vld [vmem:[#allocation5 + $0xb4] sm:$0xff]
    %v172 = vld [vmem:[#allocation5 + $0xbc] sm:$0xff]
    %v173 = vld [vmem:[#allocation5 + $0xc4] sm:$0xf]
    %v174 = vld [vmem:[#allocation5 + $0xc8] sm:$0xff]
    %v175 = vld [vmem:[#allocation5 + $0xd0] sm:$0xff]
    %v176 = vld [vmem:[#allocation5 + $0xd8] sm:$0xf]
    %v177 = vld [vmem:[#allocation5 + $0xdc] sm:$0xff]
    %v178 = vld [vmem:[#allocation5 + $0xe4] sm:$0xff]
    %v179 = vld [vmem:[#allocation5 + $0xec] sm:$0xf]
    %v180 = vld [vmem:[#allocation5 + $0xf0] sm:$0xff]
    %v181 = vld [vmem:[#allocation5 + $0xf8] sm:$0xff]
    %v182 = vld [vmem:[#allocation5 + $0x100] sm:$0xf]
    %v183 = vld [vmem:[#allocation5 + $0x104] sm:$0xff]
    %v184 = vld [vmem:[#allocation5 + $0x10c] sm:$0xff]
    %v185 = vld [vmem:[#allocation5 + $0x114] sm:$0xf]
    %v186 = vld [vmem:[#allocation5 + $0x118] sm:$0xff]
    %v187 = vld [vmem:[#allocation5 + $0x120] sm:$0xff]
    %v188 = vld [vmem:[#allocation5 + $0x128] sm:$0xf]
    %v189 = vld [vmem:[#allocation5 + $0x12c] sm:$0xff]
    %v190 = vld [vmem:[#allocation5 + $0x134] sm:$0xff]
    %v191 = vld [vmem:[#allocation5 + $0x13c] sm:$0xf]
    %200 = vrot.lane.b32.xlu0 %v129, 2
    %v201 = vpop.permute.xlu0 %200
    %202 = vrot.lane.b32.xlu0 %v131, 2
    %v203 = vpop.permute.xlu0 %202
    %204 = vrot.lane.b32.xlu0 %v133, 2
    %v205 = vpop.permute.xlu0 %204
    %206 = vrot.lane.b32.xlu0 %v135, 2
    %v207 = vpop.permute.xlu0 %206
    %208 = vrot.lane.b32.xlu0 %v137, 2
    %v209 = vpop.permute.xlu0 %208
    %210 = vrot.lane.b32.xlu0 %v139, 2
    %v211 = vpop.permute.xlu0 %210
    %212 = vrot.lane.b32.xlu0 %v141, 2
    %v213 = vpop.permute.xlu0 %212
    %214 = vrot.lane.b32.xlu0 %v143, 2
    %v215 = vpop.permute.xlu0 %214
    %224 = vrot.lane.b32.xlu0 %v128, 2
    %v225 = vpop.permute.xlu0 %224
    %226 = vrot.lane.b32.xlu0 %v130, 2
    %v227 = vpop.permute.xlu0 %226
    %228 = vrot.lane.b32.xlu0 %v132, 2
    %v229 = vpop.permute.xlu0 %228
    %230 = vrot.lane.b32.xlu0 %v134, 2
    %v231 = vpop.permute.xlu0 %230
    %232 = vrot.lane.b32.xlu0 %v136, 2
    %v233 = vpop.permute.xlu0 %232
    %234 = vrot.lane.b32.xlu0 %v138, 2
    %v235 = vpop.permute.xlu0 %234
    %236 = vrot.lane.b32.xlu0 %v140, 2
    %v237 = vpop.permute.xlu0 %236
    %238 = vrot.lane.b32.xlu0 %v142, 2
    %v239 = vpop.permute.xlu0 %238
    %vm240 = vcmask 15360
    %v241 = vsel %vm240, %v225, %v201
    %v242 = vsel %vm240, %v227, %v203
    %v243 = vsel %vm240, %v229, %v205
    %v244 = vsel %vm240, %v231, %v207
    %v245 = vsel %vm240, %v233, %v209
    %v246 = vsel %vm240, %v235, %v211
    %v247 = vsel %vm240, %v237, %v213
    %v248 = vsel %vm240, %v239, %v215
    %vm257 = vcmask 15360
    %v260 = vsel %vm257, %v201, %v225
    %v264 = vsel %vm257, %v203, %v227
    %v268 = vsel %vm257, %v205, %v229
    %v272 = vsel %vm257, %v207, %v231
    %v276 = vsel %vm257, %v209, %v233
    %v280 = vsel %vm257, %v211, %v235
    %v284 = vsel %vm257, %v213, %v237
    %v288 = vsel %vm257, %v215, %v239
    %290 = vrot.lane.b32.xlu0 %v129, 1
    %v291 = vpop.permute.xlu0 %290
    %292 = vrot.lane.b32.xlu0 %v131, 1
    %v293 = vpop.permute.xlu0 %292
    %294 = vrot.lane.b32.xlu0 %v133, 1
    %v295 = vpop.permute.xlu0 %294
    %296 = vrot.lane.b32.xlu0 %v135, 1
    %v297 = vpop.permute.xlu0 %296
    %298 = vrot.lane.b32.xlu0 %v137, 1
    %v299 = vpop.permute.xlu0 %298
    %300 = vrot.lane.b32.xlu0 %v139, 1
    %v301 = vpop.permute.xlu0 %300
    %302 = vrot.lane.b32.xlu0 %v141, 1
    %v303 = vpop.permute.xlu0 %302
    %304 = vrot.lane.b32.xlu0 %v143, 1
    %v305 = vpop.permute.xlu0 %304
    %306 = vrot.lane.b32.xlu0 %v128, 1
    %v307 = vpop.permute.xlu0 %306
    %308 = vrot.lane.b32.xlu0 %v130, 1
    %v309 = vpop.permute.xlu0 %308
    %310 = vrot.lane.b32.xlu0 %v132, 1
    %v311 = vpop.permute.xlu0 %310
    %312 = vrot.lane.b32.xlu0 %v134, 1
    %v313 = vpop.permute.xlu0 %312
    %314 = vrot.lane.b32.xlu0 %v136, 1
    %v315 = vpop.permute.xlu0 %314
    %316 = vrot.lane.b32.xlu0 %v138, 1
    %v317 = vpop.permute.xlu0 %316
    %318 = vrot.lane.b32.xlu0 %v140, 1
    %v319 = vpop.permute.xlu0 %318
    %320 = vrot.lane.b32.xlu0 %v142, 1
    %v321 = vpop.permute.xlu0 %320
    %vm322 = vcmask 7168
    %v323 = vsel %vm322, %v307, %v291
    %v324 = vsel %vm322, %v309, %v293
    %v325 = vsel %vm322, %v311, %v295
    %v326 = vsel %vm322, %v313, %v297
    %v327 = vsel %vm322, %v315, %v299
    %v328 = vsel %vm322, %v317, %v301
    %v329 = vsel %vm322, %v319, %v303
    %v330 = vsel %vm322, %v321, %v305
    %vm339 = vcmask 7168
    %v342 = vsel %vm339, %v291, %v307
    %v346 = vsel %vm339, %v293, %v309
    %v350 = vsel %vm339, %v295, %v311
    %v354 = vsel %vm339, %v297, %v313
    %v358 = vsel %vm339, %v299, %v315
    %v362 = vsel %vm339, %v301, %v317
    %v366 = vsel %vm339, %v303, %v319
    %v370 = vsel %vm339, %v305, %v321
    %372 = vrot.lane.b32.xlu0 %v128, 127
    %v373 = vpop.permute.xlu0 %372
    %374 = vrot.lane.b32.xlu0 %v129, 127
    %v375 = vpop.permute.xlu0 %374
    %376 = vrot.lane.b32.xlu0 %v130, 127
    %v377 = vpop.permute.xlu0 %376
    %378 = vrot.lane.b32.xlu0 %v131, 127
    %v379 = vpop.permute.xlu0 %378
    %380 = vrot.lane.b32.xlu0 %v132, 127
    %v381 = vpop.permute.xlu0 %380
    %382 = vrot.lane.b32.xlu0 %v133, 127
    %v383 = vpop.permute.xlu0 %382
    %384 = vrot.lane.b32.xlu0 %v134, 127
    %v385 = vpop.permute.xlu0 %384
    %386 = vrot.lane.b32.xlu0 %v135, 127
    %v387 = vpop.permute.xlu0 %386
    %388 = vrot.lane.b32.xlu0 %v136, 127
    %v389 = vpop.permute.xlu0 %388
    %390 = vrot.lane.b32.xlu0 %v137, 127
    %v391 = vpop.permute.xlu0 %390
    %392 = vrot.lane.b32.xlu0 %v138, 127
    %v393 = vpop.permute.xlu0 %392
    %394 = vrot.lane.b32.xlu0 %v139, 127
    %v395 = vpop.permute.xlu0 %394
    %396 = vrot.lane.b32.xlu0 %v140, 127
    %v397 = vpop.permute.xlu0 %396
    %398 = vrot.lane.b32.xlu0 %v141, 127
    %v399 = vpop.permute.xlu0 %398
    %400 = vrot.lane.b32.xlu0 %v142, 127
    %v401 = vpop.permute.xlu0 %400
    %402 = vrot.lane.b32.xlu0 %v143, 127
    %v403 = vpop.permute.xlu0 %402
    %vm404 = vcmask 1039360
    %v405 = vsel %vm404, %v373, %v375
    %v406 = vsel %vm404, %v377, %v379
    %v407 = vsel %vm404, %v381, %v383
    %v408 = vsel %vm404, %v385, %v387
    %v409 = vsel %vm404, %v389, %v391
    %v410 = vsel %vm404, %v393, %v395
    %v411 = vsel %vm404, %v397, %v399
    %v412 = vsel %vm404, %v401, %v403
    %vm421 = vcmask 1039360
    %v424 = vsel %vm421, %v375, %v373
    %v428 = vsel %vm421, %v379, %v377
    %v432 = vsel %vm421, %v383, %v381
    %v436 = vsel %vm421, %v387, %v385
    %v440 = vsel %vm421, %v391, %v389
    %v444 = vsel %vm421, %v395, %v393
    %v448 = vsel %vm421, %v399, %v397
    %v452 = vsel %vm421, %v403, %v401
    %454 = vrot.lane.b32.xlu0 %v128, 126
    %v455 = vpop.permute.xlu0 %454
    %456 = vrot.lane.b32.xlu0 %v129, 126
    %v457 = vpop.permute.xlu0 %456
    %458 = vrot.lane.b32.xlu0 %v130, 126
    %v459 = vpop.permute.xlu0 %458
    %460 = vrot.lane.b32.xlu0 %v131, 126
    %v461 = vpop.permute.xlu0 %460
    %462 = vrot.lane.b32.xlu0 %v132, 126
    %v463 = vpop.permute.xlu0 %462
    %464 = vrot.lane.b32.xlu0 %v133, 126
    %v465 = vpop.permute.xlu0 %464
    %466 = vrot.lane.b32.xlu0 %v134, 126
    %v467 = vpop.permute.xlu0 %466
    %468 = vrot.lane.b32.xlu0 %v135, 126
    %v469 = vpop.permute.xlu0 %468
    %470 = vrot.lane.b32.xlu0 %v136, 126
    %v471 = vpop.permute.xlu0 %470
    %472 = vrot.lane.b32.xlu0 %v137, 126
    %v473 = vpop.permute.xlu0 %472
    %474 = vrot.lane.b32.xlu0 %v138, 126
    %v475 = vpop.permute.xlu0 %474
    %476 = vrot.lane.b32.xlu0 %v139, 126
    %v477 = vpop.permute.xlu0 %476
    %478 = vrot.lane.b32.xlu0 %v140, 126
    %v479 = vpop.permute.xlu0 %478
    %480 = vrot.lane.b32.xlu0 %v141, 126
    %v481 = vpop.permute.xlu0 %480
    %482 = vrot.lane.b32.xlu0 %v142, 126
    %v483 = vpop.permute.xlu0 %482
    %484 = vrot.lane.b32.xlu0 %v143, 126
    %v485 = vpop.permute.xlu0 %484
    %vm486 = vcmask 1031168
    %v487 = vsel %vm486, %v455, %v457
    %v488 = vsel %vm486, %v459, %v461
    %v489 = vsel %vm486, %v463, %v465
    %v490 = vsel %vm486, %v467, %v469
    %v491 = vsel %vm486, %v471, %v473
    %v492 = vsel %vm486, %v475, %v477
    %v493 = vsel %vm486, %v479, %v481
    %v494 = vsel %vm486, %v483, %v485
    %vm503 = vcmask 1031168
    %v506 = vsel %vm503, %v457, %v455
    %v510 = vsel %vm503, %v461, %v459
    %v514 = vsel %vm503, %v465, %v463
    %v518 = vsel %vm503, %v469, %v467
    %v522 = vsel %vm503, %v473, %v471
    %v526 = vsel %vm503, %v477, %v475
    %v530 = vsel %vm503, %v481, %v479
    %v534 = vsel %vm503, %v485, %v483
    %v536 = vld [vmem:[%s3] sm:$0xff]
    %v537 = vld [vmem:[%s3 + $0x8] sm:$0xff]
    %v538 = vld [vmem:[%s3 + $0x10] sm:$0xff]
    %v539 = vld [vmem:[%s3 + $0x18] sm:$0xff]
    %v540 = vld [vmem:[%s3 + $0x20] sm:$0xff]
    %v541 = vld [vmem:[%s3 + $0x28] sm:$0xff]
    %v542 = vld [vmem:[%s3 + $0x30] sm:$0xff]
    %v543 = vld [vmem:[%s3 + $0x38] sm:$0xff]
    %v544 = vld [vmem:[%s3 + $0x40] sm:$0xff]
    %v545 = vld [vmem:[%s3 + $0x48] sm:$0xff]
    %v546 = vld [vmem:[%s3 + $0x50] sm:$0xff]
    %v547 = vld [vmem:[%s3 + $0x58] sm:$0xff]
    %v548 = vld [vmem:[%s3 + $0x60] sm:$0xff]
    %v549 = vld [vmem:[%s3 + $0x68] sm:$0xff]
    %v550 = vld [vmem:[%s3 + $0x70] sm:$0xff]
    %v551 = vld [vmem:[%s3 + $0x78] sm:$0xff]
    %553 = vset.pattern.permute.xlu0 0
    %554 = vperm.xlu0 %553, %v536
    %v555 = vpop.permute.xlu0 %554
    %558 = vset.pattern.permute.xlu0 0
    %559 = vperm.xlu0 %558, %v537
    %v560 = vpop.permute.xlu0 %559
    %563 = vset.pattern.permute.xlu0 0
    %564 = vperm.xlu0 %563, %v538
    %v565 = vpop.permute.xlu0 %564
    %568 = vset.pattern.permute.xlu0 0
    %569 = vperm.xlu0 %568, %v539
    %v570 = vpop.permute.xlu0 %569
    %573 = vset.pattern.permute.xlu0 0
    %574 = vperm.xlu0 %573, %v540
    %v575 = vpop.permute.xlu0 %574
    %578 = vset.pattern.permute.xlu0 0
    %579 = vperm.xlu0 %578, %v541
    %v580 = vpop.permute.xlu0 %579
    %583 = vset.pattern.permute.xlu0 0
    %584 = vperm.xlu0 %583, %v542
    %v585 = vpop.permute.xlu0 %584
    %588 = vset.pattern.permute.xlu0 0
    %589 = vperm.xlu0 %588, %v543
    %v590 = vpop.permute.xlu0 %589
    %593 = vset.pattern.permute.xlu0 0
    %594 = vperm.xlu0 %593, %v544
    %v595 = vpop.permute.xlu0 %594
    %598 = vset.pattern.permute.xlu0 0
    %599 = vperm.xlu0 %598, %v545
    %v600 = vpop.permute.xlu0 %599
    %603 = vset.pattern.permute.xlu0 0
    %604 = vperm.xlu0 %603, %v546
    %v605 = vpop.permute.xlu0 %604
    %608 = vset.pattern.permute.xlu0 0
    %609 = vperm.xlu0 %608, %v547
    %v610 = vpop.permute.xlu0 %609
    %613 = vset.pattern.permute.xlu0 0
    %614 = vperm.xlu0 %613, %v548
    %v615 = vpop.permute.xlu0 %614
    %618 = vset.pattern.permute.xlu0 0
    %619 = vperm.xlu0 %618, %v549
    %v620 = vpop.permute.xlu0 %619
    %623 = vset.pattern.permute.xlu0 0
    %624 = vperm.xlu0 %623, %v550
    %v625 = vpop.permute.xlu0 %624
    %628 = vset.pattern.permute.xlu0 0
    %629 = vperm.xlu0 %628, %v551
    %v630 = vpop.permute.xlu0 %629
    %v680 = vunpack.c.l.b16 %v144
    %v681 = vunpack.c.h.b16 %v144
    %v682 = vunpack.c.l.b16 %v145
    %v683 = vunpack.c.h.b16 %v145
    %v684 = vunpack.c.l.b16 %v146
    %v685 = vunpack.c.l.b16 %v147
    %v686 = vunpack.c.h.b16 %v147
    %v687 = vunpack.c.l.b16 %v148
    %v688 = vunpack.c.h.b16 %v148
    %v689 = vunpack.c.l.b16 %v149
    %v690 = vunpack.c.l.b16 %v150
    %v691 = vunpack.c.h.b16 %v150
    %v692 = vunpack.c.l.b16 %v151
    %v693 = vunpack.c.h.b16 %v151
    %v694 = vunpack.c.l.b16 %v152
    %v695 = vunpack.c.l.b16 %v153
    %v696 = vunpack.c.h.b16 %v153
    %v697 = vunpack.c.l.b16 %v154
    %v698 = vunpack.c.h.b16 %v154
    %v699 = vunpack.c.l.b16 %v155
    %v700 = vunpack.c.l.b16 %v156
    %v701 = vunpack.c.h.b16 %v156
    %v702 = vunpack.c.l.b16 %v157
    %v703 = vunpack.c.h.b16 %v157
    %v704 = vunpack.c.l.b16 %v158
    %v705 = vunpack.c.l.b16 %v159
    %v706 = vunpack.c.h.b16 %v159
    %v707 = vunpack.c.l.b16 %v160
    %v708 = vunpack.c.h.b16 %v160
    %v709 = vunpack.c.l.b16 %v161
    %v710 = vunpack.c.l.b16 %v162
    %v711 = vunpack.c.h.b16 %v162
    %v712 = vunpack.c.l.b16 %v163
    %v713 = vunpack.c.h.b16 %v163
    %v714 = vunpack.c.l.b16 %v164
    %v715 = vunpack.c.l.b16 %v165
    %v716 = vunpack.c.h.b16 %v165
    %v717 = vunpack.c.l.b16 %v166
    %v718 = vunpack.c.h.b16 %v166
    %v719 = vunpack.c.l.b16 %v167
    %v720 = vunpack.c.l.b16 %v168
    %v721 = vunpack.c.h.b16 %v168
    %v722 = vunpack.c.l.b16 %v169
    %v723 = vunpack.c.h.b16 %v169
    %v724 = vunpack.c.l.b16 %v170
    %v725 = vunpack.c.l.b16 %v171
    %v726 = vunpack.c.h.b16 %v171
    %v727 = vunpack.c.l.b16 %v172
    %v728 = vunpack.c.h.b16 %v172
    %v729 = vunpack.c.l.b16 %v173
    %v730 = vunpack.c.l.b16 %v174
    %v731 = vunpack.c.h.b16 %v174
    %v732 = vunpack.c.l.b16 %v175
    %v733 = vunpack.c.h.b16 %v175
    %v734 = vunpack.c.l.b16 %v176
    %v735 = vunpack.c.l.b16 %v177
    %v736 = vunpack.c.h.b16 %v177
    %v737 = vunpack.c.l.b16 %v178
    %v738 = vunpack.c.h.b16 %v178
    %v739 = vunpack.c.l.b16 %v179
    %v740 = vunpack.c.l.b16 %v180
    %v741 = vunpack.c.h.b16 %v180
    %v742 = vunpack.c.l.b16 %v181
    %v743 = vunpack.c.h.b16 %v181
    %v744 = vunpack.c.l.b16 %v182
    %v745 = vunpack.c.l.b16 %v183
    %v746 = vunpack.c.h.b16 %v183
    %v747 = vunpack.c.l.b16 %v184
    %v748 = vunpack.c.h.b16 %v184
    %v749 = vunpack.c.l.b16 %v185
    %v750 = vunpack.c.l.b16 %v186
    %v751 = vunpack.c.h.b16 %v186
    %v752 = vunpack.c.l.b16 %v187
    %v753 = vunpack.c.h.b16 %v187
    %v754 = vunpack.c.l.b16 %v188
    %v755 = vunpack.c.l.b16 %v189
    %v756 = vunpack.c.h.b16 %v189
    %v757 = vunpack.c.l.b16 %v190
    %v758 = vunpack.c.h.b16 %v190
    %v759 = vunpack.c.l.b16 %v191
    %v760 = vpack.c.b16 %v685, %v680
    %v761 = vpack.c.b16 %v686, %v681
    %v762 = vpack.c.b16 %v687, %v682
    %v763 = vpack.c.b16 %v688, %v683
    %v764 = vpack.c.b16 %v689, %v684
    %v765 = vpack.c.b16 %v695, %v690
    %v766 = vpack.c.b16 %v696, %v691
    %v767 = vpack.c.b16 %v697, %v692
    %v768 = vpack.c.b16 %v698, %v693
    %v769 = vpack.c.b16 %v699, %v694
    %v770 = vpack.c.b16 %v705, %v700
    %v771 = vpack.c.b16 %v706, %v701
    %v772 = vpack.c.b16 %v707, %v702
    %v773 = vpack.c.b16 %v708, %v703
    %v774 = vpack.c.b16 %v709, %v704
    %v775 = vpack.c.b16 %v715, %v710
    %v776 = vpack.c.b16 %v716, %v711
    %v777 = vpack.c.b16 %v717, %v712
    %v778 = vpack.c.b16 %v718, %v713
    %v779 = vpack.c.b16 %v719, %v714
    %v780 = vpack.c.b16 %v725, %v720
    %v781 = vpack.c.b16 %v726, %v721
    %v782 = vpack.c.b16 %v727, %v722
    %v783 = vpack.c.b16 %v728, %v723
    %v784 = vpack.c.b16 %v729, %v724
    %v785 = vpack.c.b16 %v735, %v730
    %v786 = vpack.c.b16 %v736, %v731
    %v787 = vpack.c.b16 %v737, %v732
    %v788 = vpack.c.b16 %v738, %v733
    %v789 = vpack.c.b16 %v739, %v734
    %v790 = vpack.c.b16 %v745, %v740
    %v791 = vpack.c.b16 %v746, %v741
    %v792 = vpack.c.b16 %v747, %v742
    %v793 = vpack.c.b16 %v748, %v743
    %v794 = vpack.c.b16 %v749, %v744
    %v795 = vpack.c.b16 %v755, %v750
    %v796 = vpack.c.b16 %v756, %v751
    %v797 = vpack.c.b16 %v757, %v752
    %v798 = vpack.c.b16 %v758, %v753
    %v799 = vpack.c.b16 %v759, %v754
    %840 = vmatprep.subr.bf16.mxu0 %v248
    %841 = vmatpush1.bf16.msra.mxu0 %v288
    %842 = vmatprep.subr.bf16.mxu0 %v247
    %843 = vmatpush1.bf16.msra.mxu0 %v284
    %844 = vmatprep.subr.bf16.mxu0 %v246
    %845 = vmatpush1.bf16.msra.mxu0 %v280
    %846 = vmatprep.subr.bf16.mxu0 %v245
    %847 = vmatpush1.bf16.msra.mxu0 %v276
    %848 = vmatprep.subr.bf16.mxu0 %v244
    %849 = vmatpush1.bf16.msra.mxu0 %v272
    %850 = vmatprep.subr.bf16.mxu0 %v243
    %851 = vmatpush1.bf16.msra.mxu0 %v268
    %852 = vmatprep.subr.bf16.mxu0 %v242
    %853 = vmatpush1.bf16.msra.mxu0 %v264
    %854 = vmatprep.subr.bf16.mxu0 %v241
    %855 = vmatpush1.bf16.msra.mxu0 %v260
    %856 = vmatprep.subr.bf16.mxu0 %v330
    %857 = vmatpush2.bf16.msra.mxu0 %v370
    %858 = vmatprep.subr.bf16.mxu0 %v329
    %859 = vmatpush2.bf16.msra.mxu0 %v366
    %860 = vmatprep.subr.bf16.mxu0 %v328
    %861 = vmatpush2.bf16.msra.mxu0 %v362
    %862 = vmatprep.subr.bf16.mxu0 %v327
    %863 = vmatpush2.bf16.msra.mxu0 %v358
    %864 = vmatprep.subr.bf16.mxu0 %v326
    %865 = vmatpush2.bf16.msra.mxu0 %v354
    %866 = vmatprep.subr.bf16.mxu0 %v325
    %867 = vmatpush2.bf16.msra.mxu0 %v350
    %868 = vmatprep.subr.bf16.mxu0 %v324
    %869 = vmatpush2.bf16.msra.mxu0 %v346
    %870 = vmatprep.subr.bf16.mxu0 %v323
    %871 = vmatpush2.bf16.msra.mxu0 %v342
    %872 = vmatprep.mubr.bf16.mxu0 %v761
    %873 = vmatmul.mubr.bf16.gmra.mxu0 %v760
    %v874 = vpop.f32.mrf.mxu0
    %v875 = vadd.f32 %v555, %v874
    %v876 = vpop.f32.mrf.mxu0
    %v877 = vadd.f32 %v555, %v876
    %v878 = vpop.f32.mrf.mxu0
    %v879 = vadd.f32 %v560, %v878
    %v880 = vpop.f32.mrf.mxu0
    %v881 = vadd.f32 %v560, %v880
    %882 = vmatprep.mubr.bf16.mxu0 %v766
    %883 = vmatmul.mubr.bf16.gmra.mxu0 %v765
    %v884 = vpop.f32.mrf.mxu0
    %v885 = vadd.f32 %v565, %v884
    %v886 = vpop.f32.mrf.mxu0
    %v887 = vadd.f32 %v565, %v886
    %v888 = vpop.f32.mrf.mxu0
    %v889 = vadd.f32 %v570, %v888
    %v890 = vpop.f32.mrf.mxu0
    %v891 = vadd.f32 %v570, %v890
    %892 = vmatprep.mubr.bf16.mxu0 %v771
    %893 = vmatmul.mubr.bf16.gmra.mxu0 %v770
    %v894 = vpop.f32.mrf.mxu0
    %v895 = vadd.f32 %v575, %v894
    %v896 = vpop.f32.mrf.mxu0
    %v897 = vadd.f32 %v575, %v896
    %v898 = vpop.f32.mrf.mxu0
    %v899 = vadd.f32 %v580, %v898
    %v900 = vpop.f32.mrf.mxu0
    %v901 = vadd.f32 %v580, %v900
    %902 = vmatprep.mubr.bf16.mxu0 %v776
    %903 = vmatmul.mubr.bf16.gmra.mxu0 %v775
    %v904 = vpop.f32.mrf.mxu0
    %v905 = vadd.f32 %v585, %v904
    %v906 = vpop.f32.mrf.mxu0
    %v907 = vadd.f32 %v585, %v906
    %v908 = vpop.f32.mrf.mxu0
    %v909 = vadd.f32 %v590, %v908
    %v910 = vpop.f32.mrf.mxu0
    %v911 = vadd.f32 %v590, %v910
    %912 = vmatprep.mubr.bf16.mxu0 %v781
    %913 = vmatmul.mubr.bf16.gmra.mxu0 %v780
    %v914 = vpop.f32.mrf.mxu0
    %v915 = vadd.f32 %v595, %v914
    %v916 = vpop.f32.mrf.mxu0
    %v917 = vadd.f32 %v595, %v916
    %v918 = vpop.f32.mrf.mxu0
    %v919 = vadd.f32 %v600, %v918
    %v920 = vpop.f32.mrf.mxu0
    %v921 = vadd.f32 %v600, %v920
    %922 = vmatprep.mubr.bf16.mxu0 %v786
    %923 = vmatmul.mubr.bf16.gmra.mxu0 %v785
    %v924 = vpop.f32.mrf.mxu0
    %v925 = vadd.f32 %v605, %v924
    %v926 = vpop.f32.mrf.mxu0
    %v927 = vadd.f32 %v605, %v926
    %v928 = vpop.f32.mrf.mxu0
    %v929 = vadd.f32 %v610, %v928
    %v930 = vpop.f32.mrf.mxu0
    %v931 = vadd.f32 %v610, %v930
    %932 = vmatprep.mubr.bf16.mxu0 %v791
    %933 = vmatmul.mubr.bf16.gmra.mxu0 %v790
    %v934 = vpop.f32.mrf.mxu0
    %v935 = vadd.f32 %v615, %v934
    %v936 = vpop.f32.mrf.mxu0
    %v937 = vadd.f32 %v615, %v936
    %v938 = vpop.f32.mrf.mxu0
    %v939 = vadd.f32 %v620, %v938
    %v940 = vpop.f32.mrf.mxu0
    %v941 = vadd.f32 %v620, %v940
    %942 = vmatprep.mubr.bf16.mxu0 %v796
    %943 = vmatmul.mubr.bf16.gmra.mxu0 %v795
    %v944 = vpop.f32.mrf.mxu0
    %v945 = vadd.f32 %v625, %v944
    %v946 = vpop.f32.mrf.mxu0
    %v947 = vadd.f32 %v625, %v946
    %v948 = vpop.f32.mrf.mxu0
    %v949 = vadd.f32 %v630, %v948
    %v950 = vpop.f32.mrf.mxu0
    %v951 = vadd.f32 %v630, %v950
    %952 = vdwg.mxu0
    %953 = vmatprep.subr.bf16.mxu0 %v143
    %954 = vmatpush1.bf16.msra.mxu0 %v142
    %955 = vmatprep.subr.bf16.mxu0 %v141
    %956 = vmatpush1.bf16.msra.mxu0 %v140
    %957 = vmatprep.subr.bf16.mxu0 %v139
    %958 = vmatpush1.bf16.msra.mxu0 %v138
    %959 = vmatprep.subr.bf16.mxu0 %v137
    %960 = vmatpush1.bf16.msra.mxu0 %v136
    %961 = vmatprep.subr.bf16.mxu0 %v135
    %962 = vmatpush1.bf16.msra.mxu0 %v134
    %963 = vmatprep.subr.bf16.mxu0 %v133
    %964 = vmatpush1.bf16.msra.mxu0 %v132
    %965 = vmatprep.subr.bf16.mxu0 %v131
    %966 = vmatpush1.bf16.msra.mxu0 %v130
    %967 = vmatprep.subr.bf16.mxu0 %v129
    %968 = vmatpush1.bf16.msra.mxu0 %v128
    %969 = vmatprep.subr.bf16.mxu0 %v452
    %970 = vmatpush2.bf16.msra.mxu0 %v412
    %971 = vmatprep.subr.bf16.mxu0 %v448
    %972 = vmatpush2.bf16.msra.mxu0 %v411
    %973 = vmatprep.subr.bf16.mxu0 %v444
    %974 = vmatpush2.bf16.msra.mxu0 %v410
    %975 = vmatprep.subr.bf16.mxu0 %v440
    %976 = vmatpush2.bf16.msra.mxu0 %v409
    %977 = vmatprep.subr.bf16.mxu0 %v436
    %978 = vmatpush2.bf16.msra.mxu0 %v408
    %979 = vmatprep.subr.bf16.mxu0 %v432
    %980 = vmatpush2.bf16.msra.mxu0 %v407
    %981 = vmatprep.subr.bf16.mxu0 %v428
    %982 = vmatpush2.bf16.msra.mxu0 %v406
    %983 = vmatprep.subr.bf16.mxu0 %v424
    %984 = vmatpush2.bf16.msra.mxu0 %v405
    %985 = vmatprep.mubr.bf16.mxu0 %v763
    %986 = vmatmul.mubr.bf16.gmra.mxu0 %v762
    %v987 = vpop.f32.mrf.mxu0
    %v988 = vadd.f32 %v875, %v987
    %v989 = vpop.f32.mrf.mxu0
    %v990 = vadd.f32 %v877, %v989
    %v991 = vpop.f32.mrf.mxu0
    %v992 = vadd.f32 %v879, %v991
    %v993 = vpop.f32.mrf.mxu0
    %v994 = vadd.f32 %v881, %v993
    %995 = vmatprep.mubr.bf16.mxu0 %v768
    %996 = vmatmul.mubr.bf16.gmra.mxu0 %v767
    %v997 = vpop.f32.mrf.mxu0
    %v998 = vadd.f32 %v885, %v997
    %v999 = vpop.f32.mrf.mxu0
    %v1000 = vadd.f32 %v887, %v999
    %v1001 = vpop.f32.mrf.mxu0
    %v1002 = vadd.f32 %v889, %v1001
    %v1003 = vpop.f32.mrf.mxu0
    %v1004 = vadd.f32 %v891, %v1003
    %1005 = vmatprep.mubr.bf16.mxu0 %v773
    %1006 = vmatmul.mubr.bf16.gmra.mxu0 %v772
    %v1007 = vpop.f32.mrf.mxu0
    %v1008 = vadd.f32 %v895, %v1007
    %v1009 = vpop.f32.mrf.mxu0
    %v1010 = vadd.f32 %v897, %v1009
    %v1011 = vpop.f32.mrf.mxu0
    %v1012 = vadd.f32 %v899, %v1011
    %v1013 = vpop.f32.mrf.mxu0
    %v1014 = vadd.f32 %v901, %v1013
    %1015 = vmatprep.mubr.bf16.mxu0 %v778
    %1016 = vmatmul.mubr.bf16.gmra.mxu0 %v777
    %v1017 = vpop.f32.mrf.mxu0
    %v1018 = vadd.f32 %v905, %v1017
    %v1019 = vpop.f32.mrf.mxu0
    %v1020 = vadd.f32 %v907, %v1019
    %v1021 = vpop.f32.mrf.mxu0
    %v1022 = vadd.f32 %v909, %v1021
    %v1023 = vpop.f32.mrf.mxu0
    %v1024 = vadd.f32 %v911, %v1023
    %1025 = vmatprep.mubr.bf16.mxu0 %v783
    %1026 = vmatmul.mubr.bf16.gmra.mxu0 %v782
    %v1027 = vpop.f32.mrf.mxu0
    %v1028 = vadd.f32 %v915, %v1027
    %v1029 = vpop.f32.mrf.mxu0
    %v1030 = vadd.f32 %v917, %v1029
    %v1031 = vpop.f32.mrf.mxu0
    %v1032 = vadd.f32 %v919, %v1031
    %v1033 = vpop.f32.mrf.mxu0
    %v1034 = vadd.f32 %v921, %v1033
    %1035 = vmatprep.mubr.bf16.mxu0 %v788
    %1036 = vmatmul.mubr.bf16.gmra.mxu0 %v787
    %v1037 = vpop.f32.mrf.mxu0
    %v1038 = vadd.f32 %v925, %v1037
    %v1039 = vpop.f32.mrf.mxu0
    %v1040 = vadd.f32 %v927, %v1039
    %v1041 = vpop.f32.mrf.mxu0
    %v1042 = vadd.f32 %v929, %v1041
    %v1043 = vpop.f32.mrf.mxu0
    %v1044 = vadd.f32 %v931, %v1043
    %1045 = vmatprep.mubr.bf16.mxu0 %v793
    %1046 = vmatmul.mubr.bf16.gmra.mxu0 %v792
    %v1047 = vpop.f32.mrf.mxu0
    %v1048 = vadd.f32 %v935, %v1047
    %v1049 = vpop.f32.mrf.mxu0
    %v1050 = vadd.f32 %v937, %v1049
    %v1051 = vpop.f32.mrf.mxu0
    %v1052 = vadd.f32 %v939, %v1051
    %v1053 = vpop.f32.mrf.mxu0
    %v1054 = vadd.f32 %v941, %v1053
    %1055 = vmatprep.mubr.bf16.mxu0 %v798
    %1056 = vmatmul.mubr.bf16.gmra.mxu0 %v797
    %v1057 = vpop.f32.mrf.mxu0
    %v1058 = vadd.f32 %v945, %v1057
    %v1059 = vpop.f32.mrf.mxu0
    %v1060 = vadd.f32 %v947, %v1059
    %v1061 = vpop.f32.mrf.mxu0
    %v1062 = vadd.f32 %v949, %v1061
    %v1063 = vpop.f32.mrf.mxu0
    %v1064 = vadd.f32 %v951, %v1063
    %1065 = vdwg.mxu0
    %1066 = vmatprep.subr.bf16.mxu0 %v534
    %1067 = vmatpush1.bf16.msra.mxu0 %v494
    %1068 = vmatprep.subr.bf16.mxu0 %v530
    %1069 = vmatpush1.bf16.msra.mxu0 %v493
    %1070 = vmatprep.subr.bf16.mxu0 %v526
    %1071 = vmatpush1.bf16.msra.mxu0 %v492
    %1072 = vmatprep.subr.bf16.mxu0 %v522
    %1073 = vmatpush1.bf16.msra.mxu0 %v491
    %1074 = vmatprep.subr.bf16.mxu0 %v518
    %1075 = vmatpush1.bf16.msra.mxu0 %v490
    %1076 = vmatprep.subr.bf16.mxu0 %v514
    %1077 = vmatpush1.bf16.msra.mxu0 %v489
    %1078 = vmatprep.subr.bf16.mxu0 %v510
    %1079 = vmatpush1.bf16.msra.mxu0 %v488
    %1080 = vmatprep.subr.bf16.mxu0 %v506
    %1081 = vmatpush1.bf16.msra.mxu0 %v487
    %1082 = vmatprep.subr.bf16.mxu0 0
    %1083 = vmatpush2.bf16.msra.mxu0 0
    %1084 = vmatprep.subr.bf16.mxu0 0
    %1085 = vmatpush2.bf16.msra.mxu0 0
    %1086 = vmatprep.subr.bf16.mxu0 0
    %1087 = vmatpush2.bf16.msra.mxu0 0
    %1088 = vmatprep.subr.bf16.mxu0 0
    %1089 = vmatpush2.bf16.msra.mxu0 0
    %1090 = vmatprep.subr.bf16.mxu0 0
    %1091 = vmatpush2.bf16.msra.mxu0 0
    %1092 = vmatprep.subr.bf16.mxu0 0
    %1093 = vmatpush2.bf16.msra.mxu0 0
    %1094 = vmatprep.subr.bf16.mxu0 0
    %1095 = vmatpush2.bf16.msra.mxu0 0
    %1096 = vmatprep.subr.bf16.mxu0 0
    %1097 = vmatpush2.bf16.msra.mxu0 0
    %1098 = vmatprep.mubr.bf16.mxu0 0
    %1099 = vmatmul.mubr.bf16.gmra.mxu0 %v764
    %v1100 = vpop.f32.mrf.mxu0
    %v1101 = vadd.f32 %v988, %v1100
    %v1102 = vpop.f32.mrf.mxu0
    %v1103 = vadd.f32 %v990, %v1102
    %v1104 = vpop.f32.mrf.mxu0
    %v1105 = vadd.f32 %v992, %v1104
    %v1106 = vpop.f32.mrf.mxu0
    %v1107 = vadd.f32 %v994, %v1106
    %1108 = vmatprep.mubr.bf16.mxu0 0
    %1109 = vmatmul.mubr.bf16.gmra.mxu0 %v769
    %v1110 = vpop.f32.mrf.mxu0
    %v1111 = vadd.f32 %v998, %v1110
    %v1112 = vpop.f32.mrf.mxu0
    %v1113 = vadd.f32 %v1000, %v1112
    %v1114 = vpop.f32.mrf.mxu0
    %v1115 = vadd.f32 %v1002, %v1114
    %v1116 = vpop.f32.mrf.mxu0
    %v1117 = vadd.f32 %v1004, %v1116
    %1118 = vmatprep.mubr.bf16.mxu0 0
    %1119 = vmatmul.mubr.bf16.gmra.mxu0 %v774
    %v1120 = vpop.f32.mrf.mxu0
    %v1121 = vadd.f32 %v1008, %v1120
    %v1122 = vpop.f32.mrf.mxu0
    %v1123 = vadd.f32 %v1010, %v1122
    %v1124 = vpop.f32.mrf.mxu0
    %v1125 = vadd.f32 %v1012, %v1124
    %v1126 = vpop.f32.mrf.mxu0
    %v1127 = vadd.f32 %v1014, %v1126
    %1128 = vmatprep.mubr.bf16.mxu0 0
    %1129 = vmatmul.mubr.bf16.gmra.mxu0 %v779
    %v1130 = vpop.f32.mrf.mxu0
    %v1131 = vadd.f32 %v1018, %v1130
    %v1132 = vpop.f32.mrf.mxu0
    %v1133 = vadd.f32 %v1020, %v1132
    %v1134 = vpop.f32.mrf.mxu0
    %v1135 = vadd.f32 %v1022, %v1134
    %v1136 = vpop.f32.mrf.mxu0
    %v1137 = vadd.f32 %v1024, %v1136
    %1138 = vmatprep.mubr.bf16.mxu0 0
    %1139 = vmatmul.mubr.bf16.gmra.mxu0 %v784
    %v1140 = vpop.f32.mrf.mxu0
    %v1141 = vadd.f32 %v1028, %v1140
    %v1142 = vpop.f32.mrf.mxu0
    %v1143 = vadd.f32 %v1030, %v1142
    %v1144 = vpop.f32.mrf.mxu0
    %v1145 = vadd.f32 %v1032, %v1144
    %v1146 = vpop.f32.mrf.mxu0
    %v1147 = vadd.f32 %v1034, %v1146
    %1148 = vmatprep.mubr.bf16.mxu0 0
    %1149 = vmatmul.mubr.bf16.gmra.mxu0 %v789
    %v1150 = vpop.f32.mrf.mxu0
    %v1151 = vadd.f32 %v1038, %v1150
    %v1152 = vpop.f32.mrf.mxu0
    %v1153 = vadd.f32 %v1040, %v1152
    %v1154 = vpop.f32.mrf.mxu0
    %v1155 = vadd.f32 %v1042, %v1154
    %v1156 = vpop.f32.mrf.mxu0
    %v1157 = vadd.f32 %v1044, %v1156
    %1158 = vmatprep.mubr.bf16.mxu0 0
    %1159 = vmatmul.mubr.bf16.gmra.mxu0 %v794
    %v1160 = vpop.f32.mrf.mxu0
    %v1161 = vadd.f32 %v1048, %v1160
    %v1162 = vpop.f32.mrf.mxu0
    %v1163 = vadd.f32 %v1050, %v1162
    %v1164 = vpop.f32.mrf.mxu0
    %v1165 = vadd.f32 %v1052, %v1164
    %v1166 = vpop.f32.mrf.mxu0
    %v1167 = vadd.f32 %v1054, %v1166
    %1168 = vmatprep.mubr.bf16.mxu0 0
    %1169 = vmatmul.mubr.bf16.gmra.mxu0 %v799
    %v1170 = vpop.f32.mrf.mxu0
    %v1171 = vadd.f32 %v1058, %v1170
    %v1172 = vpop.f32.mrf.mxu0
    %v1173 = vadd.f32 %v1060, %v1172
    %v1174 = vpop.f32.mrf.mxu0
    %v1175 = vadd.f32 %v1062, %v1174
    %v1176 = vpop.f32.mrf.mxu0
    %v1177 = vadd.f32 %v1064, %v1176
    %1178 = vdwg.mxu0
    %v1179 = vmax.f32 %v1101, 0.0
    %v1180 = vmax.f32 %v1103, 0.0
    %v1181 = vmax.f32 %v1105, 0.0
    %v1182 = vmax.f32 %v1107, 0.0
    %v1183 = vmax.f32 %v1111, 0.0
    %v1184 = vmax.f32 %v1113, 0.0
    %v1185 = vmax.f32 %v1115, 0.0
    %v1186 = vmax.f32 %v1117, 0.0
    %v1187 = vmax.f32 %v1121, 0.0
    %v1188 = vmax.f32 %v1123, 0.0
    %v1189 = vmax.f32 %v1125, 0.0
    %v1190 = vmax.f32 %v1127, 0.0
    %v1191 = vmax.f32 %v1131, 0.0
    %v1192 = vmax.f32 %v1133, 0.0
    %v1193 = vmax.f32 %v1135, 0.0
    %v1194 = vmax.f32 %v1137, 0.0
    %v1195 = vmax.f32 %v1141, 0.0
    %v1196 = vmax.f32 %v1143, 0.0
    %v1197 = vmax.f32 %v1145, 0.0
    %v1198 = vmax.f32 %v1147, 0.0
    %v1199 = vmax.f32 %v1151, 0.0
    %v1200 = vmax.f32 %v1153, 0.0
    %v1201 = vmax.f32 %v1155, 0.0
    %v1202 = vmax.f32 %v1157, 0.0
    %v1203 = vmax.f32 %v1161, 0.0
    %v1204 = vmax.f32 %v1163, 0.0
    %v1205 = vmax.f32 %v1165, 0.0
    %v1206 = vmax.f32 %v1167, 0.0
    %v1207 = vmax.f32 %v1171, 0.0
    %v1208 = vmax.f32 %v1173, 0.0
    %v1209 = vmax.f32 %v1175, 0.0
    %v1210 = vmax.f32 %v1177, 0.0
    %v1211 = vld [vmem:[#allocation2] sm:$0x3]
    %v1213 = vlaneseq
    %v1214 = vshrl.u32 %v1213, 7
    %v1215 = vsub.s32 0, %v1214
    %v1216 = vrot.slane %v1211, %v1215
    %v1217 = vlaneseq
    %v1218 = vshrl.u32 %v1217, 7
    %v1219 = vsub.s32 1, %v1218
    %v1220 = vrot.slane %v1211, %v1219
    %v1223 = vmul.f32 %v1179, %v1216
    %v1224 = vmul.f32 %v1180, %v1220
    %v1225 = vmul.f32 %v1181, %v1216
    %v1226 = vmul.f32 %v1182, %v1220
    %v1227 = vmul.f32 %v1183, %v1216
    %v1228 = vmul.f32 %v1184, %v1220
    %v1229 = vmul.f32 %v1185, %v1216
    %v1230 = vmul.f32 %v1186, %v1220
    %v1231 = vmul.f32 %v1187, %v1216
    %v1232 = vmul.f32 %v1188, %v1220
    %v1233 = vmul.f32 %v1189, %v1216
    %v1234 = vmul.f32 %v1190, %v1220
    %v1235 = vmul.f32 %v1191, %v1216
    %v1236 = vmul.f32 %v1192, %v1220
    %v1237 = vmul.f32 %v1193, %v1216
    %v1238 = vmul.f32 %v1194, %v1220
    %v1239 = vmul.f32 %v1195, %v1216
    %v1240 = vmul.f32 %v1196, %v1220
    %v1241 = vmul.f32 %v1197, %v1216
    %v1242 = vmul.f32 %v1198, %v1220
    %v1243 = vmul.f32 %v1199, %v1216
    %v1244 = vmul.f32 %v1200, %v1220
    %v1245 = vmul.f32 %v1201, %v1216
    %v1246 = vmul.f32 %v1202, %v1220
    %v1247 = vmul.f32 %v1203, %v1216
    %v1248 = vmul.f32 %v1204, %v1220
    %v1249 = vmul.f32 %v1205, %v1216
    %v1250 = vmul.f32 %v1206, %v1220
    %v1251 = vmul.f32 %v1207, %v1216
    %v1252 = vmul.f32 %v1208, %v1220
    %v1253 = vmul.f32 %v1209, %v1216
    %v1254 = vmul.f32 %v1210, %v1220
    %v1255 = vpack.c.bf16 %v1225, %v1223
    %v1256 = vpack.c.bf16 %v1226, %v1224
    %v1257 = vpack.c.bf16 %v1229, %v1227
    %v1258 = vpack.c.bf16 %v1230, %v1228
    %v1259 = vpack.c.bf16 %v1233, %v1231
    %v1260 = vpack.c.bf16 %v1234, %v1232
    %v1261 = vpack.c.bf16 %v1237, %v1235
    %v1262 = vpack.c.bf16 %v1238, %v1236
    %v1263 = vpack.c.bf16 %v1241, %v1239
    %v1264 = vpack.c.bf16 %v1242, %v1240
    %v1265 = vpack.c.bf16 %v1245, %v1243
    %v1266 = vpack.c.bf16 %v1246, %v1244
    %v1267 = vpack.c.bf16 %v1249, %v1247
    %v1268 = vpack.c.bf16 %v1250, %v1248
    %v1269 = vpack.c.bf16 %v1253, %v1251
    %v1270 = vpack.c.bf16 %v1254, %v1252
    %v1271 = vld [vmem:[#allocation7] sm:$0xff]
    %v1272 = vld [vmem:[#allocation7 + $0x8] sm:$0xff]
    %v1273 = vld [vmem:[#allocation7 + $0x10] sm:$0xf]
    %v1274 = vld [vmem:[#allocation7 + $0x14] sm:$0xff]
    %v1275 = vld [vmem:[#allocation7 + $0x1c] sm:$0xff]
    %v1276 = vld [vmem:[#allocation7 + $0x24] sm:$0xf]
    %v1277 = vld [vmem:[#allocation7 + $0x28] sm:$0xff]
    %v1278 = vld [vmem:[#allocation7 + $0x30] sm:$0xff]
    %v1279 = vld [vmem:[#allocation7 + $0x38] sm:$0xf]
    %v1280 = vld [vmem:[#allocation7 + $0x3c] sm:$0xff]
    %v1281 = vld [vmem:[#allocation7 + $0x44] sm:$0xff]
    %v1282 = vld [vmem:[#allocation7 + $0x4c] sm:$0xf]
    %v1283 = vld [vmem:[#allocation7 + $0x50] sm:$0xff]
    %v1284 = vld [vmem:[#allocation7 + $0x58] sm:$0xff]
    %v1285 = vld [vmem:[#allocation7 + $0x60] sm:$0xf]
    %v1286 = vld [vmem:[#allocation7 + $0x64] sm:$0xff]
    %v1287 = vld [vmem:[#allocation7 + $0x6c] sm:$0xff]
    %v1288 = vld [vmem:[#allocation7 + $0x74] sm:$0xf]
    %v1289 = vld [vmem:[#allocation7 + $0x78] sm:$0xff]
    %v1290 = vld [vmem:[#allocation7 + $0x80] sm:$0xff]
    %v1291 = vld [vmem:[#allocation7 + $0x88] sm:$0xf]
    %v1292 = vld [vmem:[#allocation7 + $0x8c] sm:$0xff]
    %v1293 = vld [vmem:[#allocation7 + $0x94] sm:$0xff]
    %v1294 = vld [vmem:[#allocation7 + $0x9c] sm:$0xf]
    %v1295 = vld [vmem:[#allocation7 + $0xa0] sm:$0xff]
    %v1296 = vld [vmem:[#allocation7 + $0xa8] sm:$0xff]
    %v1297 = vld [vmem:[#allocation7 + $0xb0] sm:$0xf]
    %v1298 = vld [vmem:[#allocation7 + $0xb4] sm:$0xff]
    %v1299 = vld [vmem:[#allocation7 + $0xbc] sm:$0xff]
    %v1300 = vld [vmem:[#allocation7 + $0xc4] sm:$0xf]
    %v1301 = vld [vmem:[#allocation7 + $0xc8] sm:$0xff]
    %v1302 = vld [vmem:[#allocation7 + $0xd0] sm:$0xff]
    %v1303 = vld [vmem:[#allocation7 + $0xd8] sm:$0xf]
    %v1304 = vld [vmem:[#allocation7 + $0xdc] sm:$0xff]
    %v1305 = vld [vmem:[#allocation7 + $0xe4] sm:$0xff]
    %v1306 = vld [vmem:[#allocation7 + $0xec] sm:$0xf]
    %v1307 = vld [vmem:[#allocation7 + $0xf0] sm:$0xff]
    %v1308 = vld [vmem:[#allocation7 + $0xf8] sm:$0xff]
    %v1309 = vld [vmem:[#allocation7 + $0x100] sm:$0xf]
    %v1310 = vld [vmem:[#allocation7 + $0x104] sm:$0xff]
    %v1311 = vld [vmem:[#allocation7 + $0x10c] sm:$0xff]
    %v1312 = vld [vmem:[#allocation7 + $0x114] sm:$0xf]
    %v1313 = vld [vmem:[#allocation7 + $0x118] sm:$0xff]
    %v1314 = vld [vmem:[#allocation7 + $0x120] sm:$0xff]
    %v1315 = vld [vmem:[#allocation7 + $0x128] sm:$0xf]
    %v1316 = vld [vmem:[#allocation7 + $0x12c] sm:$0xff]
    %v1317 = vld [vmem:[#allocation7 + $0x134] sm:$0xff]
    %v1318 = vld [vmem:[#allocation7 + $0x13c] sm:$0xf]
    %1327 = vrot.lane.b32.xlu0 %v1256, 2
    %v1328 = vpop.permute.xlu0 %1327
    %1329 = vrot.lane.b32.xlu0 %v1258, 2
    %v1330 = vpop.permute.xlu0 %1329
    %1331 = vrot.lane.b32.xlu0 %v1260, 2
    %v1332 = vpop.permute.xlu0 %1331
    %1333 = vrot.lane.b32.xlu0 %v1262, 2
    %v1334 = vpop.permute.xlu0 %1333
    %1335 = vrot.lane.b32.xlu0 %v1264, 2
    %v1336 = vpop.permute.xlu0 %1335
    %1337 = vrot.lane.b32.xlu0 %v1266, 2
    %v1338 = vpop.permute.xlu0 %1337
    %1339 = vrot.lane.b32.xlu0 %v1268, 2
    %v1340 = vpop.permute.xlu0 %1339
    %1341 = vrot.lane.b32.xlu0 %v1270, 2
    %v1342 = vpop.permute.xlu0 %1341
    %1351 = vrot.lane.b32.xlu0 %v1255, 2
    %v1352 = vpop.permute.xlu0 %1351
    %1353 = vrot.lane.b32.xlu0 %v1257, 2
    %v1354 = vpop.permute.xlu0 %1353
    %1355 = vrot.lane.b32.xlu0 %v1259, 2
    %v1356 = vpop.permute.xlu0 %1355
    %1357 = vrot.lane.b32.xlu0 %v1261, 2
    %v1358 = vpop.permute.xlu0 %1357
    %1359 = vrot.lane.b32.xlu0 %v1263, 2
    %v1360 = vpop.permute.xlu0 %1359
    %1361 = vrot.lane.b32.xlu0 %v1265, 2
    %v1362 = vpop.permute.xlu0 %1361
    %1363 = vrot.lane.b32.xlu0 %v1267, 2
    %v1364 = vpop.permute.xlu0 %1363
    %1365 = vrot.lane.b32.xlu0 %v1269, 2
    %v1366 = vpop.permute.xlu0 %1365
    %v1367 = vsel %vm240, %v1352, %v1328
    %v1368 = vsel %vm240, %v1354, %v1330
    %v1369 = vsel %vm240, %v1356, %v1332
    %v1370 = vsel %vm240, %v1358, %v1334
    %v1371 = vsel %vm240, %v1360, %v1336
    %v1372 = vsel %vm240, %v1362, %v1338
    %v1373 = vsel %vm240, %v1364, %v1340
    %v1374 = vsel %vm240, %v1366, %v1342
    %v1385 = vsel %vm257, %v1328, %v1352
    %v1389 = vsel %vm257, %v1330, %v1354
    %v1393 = vsel %vm257, %v1332, %v1356
    %v1397 = vsel %vm257, %v1334, %v1358
    %v1401 = vsel %vm257, %v1336, %v1360
    %v1405 = vsel %vm257, %v1338, %v1362
    %v1409 = vsel %vm257, %v1340, %v1364
    %v1413 = vsel %vm257, %v1342, %v1366
    %1415 = vrot.lane.b32.xlu0 %v1256, 1
    %v1416 = vpop.permute.xlu0 %1415
    %1417 = vrot.lane.b32.xlu0 %v1258, 1
    %v1418 = vpop.permute.xlu0 %1417
    %1419 = vrot.lane.b32.xlu0 %v1260, 1
    %v1420 = vpop.permute.xlu0 %1419
    %1421 = vrot.lane.b32.xlu0 %v1262, 1
    %v1422 = vpop.permute.xlu0 %1421
    %1423 = vrot.lane.b32.xlu0 %v1264, 1
    %v1424 = vpop.permute.xlu0 %1423
    %1425 = vrot.lane.b32.xlu0 %v1266, 1
    %v1426 = vpop.permute.xlu0 %1425
    %1427 = vrot.lane.b32.xlu0 %v1268, 1
    %v1428 = vpop.permute.xlu0 %1427
    %1429 = vrot.lane.b32.xlu0 %v1270, 1
    %v1430 = vpop.permute.xlu0 %1429
    %1431 = vrot.lane.b32.xlu0 %v1255, 1
    %v1432 = vpop.permute.xlu0 %1431
    %1433 = vrot.lane.b32.xlu0 %v1257, 1
    %v1434 = vpop.permute.xlu0 %1433
    %1435 = vrot.lane.b32.xlu0 %v1259, 1
    %v1436 = vpop.permute.xlu0 %1435
    %1437 = vrot.lane.b32.xlu0 %v1261, 1
    %v1438 = vpop.permute.xlu0 %1437
    %1439 = vrot.lane.b32.xlu0 %v1263, 1
    %v1440 = vpop.permute.xlu0 %1439
    %1441 = vrot.lane.b32.xlu0 %v1265, 1
    %v1442 = vpop.permute.xlu0 %1441
    %1443 = vrot.lane.b32.xlu0 %v1267, 1
    %v1444 = vpop.permute.xlu0 %1443
    %1445 = vrot.lane.b32.xlu0 %v1269, 1
    %v1446 = vpop.permute.xlu0 %1445
    %v1447 = vsel %vm322, %v1432, %v1416
    %v1448 = vsel %vm322, %v1434, %v1418
    %v1449 = vsel %vm322, %v1436, %v1420
    %v1450 = vsel %vm322, %v1438, %v1422
    %v1451 = vsel %vm322, %v1440, %v1424
    %v1452 = vsel %vm322, %v1442, %v1426
    %v1453 = vsel %vm322, %v1444, %v1428
    %v1454 = vsel %vm322, %v1446, %v1430
    %v1465 = vsel %vm339, %v1416, %v1432
    %v1469 = vsel %vm339, %v1418, %v1434
    %v1473 = vsel %vm339, %v1420, %v1436
    %v1477 = vsel %vm339, %v1422, %v1438
    %v1481 = vsel %vm339, %v1424, %v1440
    %v1485 = vsel %vm339, %v1426, %v1442
    %v1489 = vsel %vm339, %v1428, %v1444
    %v1493 = vsel %vm339, %v1430, %v1446
    %1495 = vrot.lane.b32.xlu0 %v1255, 127
    %v1496 = vpop.permute.xlu0 %1495
    %1497 = vrot.lane.b32.xlu0 %v1256, 127
    %v1498 = vpop.permute.xlu0 %1497
    %1499 = vrot.lane.b32.xlu0 %v1257, 127
    %v1500 = vpop.permute.xlu0 %1499
    %1501 = vrot.lane.b32.xlu0 %v1258, 127
    %v1502 = vpop.permute.xlu0 %1501
    %1503 = vrot.lane.b32.xlu0 %v1259, 127
    %v1504 = vpop.permute.xlu0 %1503
    %1505 = vrot.lane.b32.xlu0 %v1260, 127
    %v1506 = vpop.permute.xlu0 %1505
    %1507 = vrot.lane.b32.xlu0 %v1261, 127
    %v1508 = vpop.permute.xlu0 %1507
    %1509 = vrot.lane.b32.xlu0 %v1262, 127
    %v1510 = vpop.permute.xlu0 %1509
    %1511 = vrot.lane.b32.xlu0 %v1263, 127
    %v1512 = vpop.permute.xlu0 %1511
    %1513 = vrot.lane.b32.xlu0 %v1264, 127
    %v1514 = vpop.permute.xlu0 %1513
    %1515 = vrot.lane.b32.xlu0 %v1265, 127
    %v1516 = vpop.permute.xlu0 %1515
    %1517 = vrot.lane.b32.xlu0 %v1266, 127
    %v1518 = vpop.permute.xlu0 %1517
    %1519 = vrot.lane.b32.xlu0 %v1267, 127
    %v1520 = vpop.permute.xlu0 %1519
    %1521 = vrot.lane.b32.xlu0 %v1268, 127
    %v1522 = vpop.permute.xlu0 %1521
    %1523 = vrot.lane.b32.xlu0 %v1269, 127
    %v1524 = vpop.permute.xlu0 %1523
    %1525 = vrot.lane.b32.xlu0 %v1270, 127
    %v1526 = vpop.permute.xlu0 %1525
    %v1527 = vsel %vm404, %v1496, %v1498
    %v1528 = vsel %vm404, %v1500, %v1502
    %v1529 = vsel %vm404, %v1504, %v1506
    %v1530 = vsel %vm404, %v1508, %v1510
    %v1531 = vsel %vm404, %v1512, %v1514
    %v1532 = vsel %vm404, %v1516, %v1518
    %v1533 = vsel %vm404, %v1520, %v1522
    %v1534 = vsel %vm404, %v1524, %v1526
    %v1545 = vsel %vm421, %v1498, %v1496
    %v1549 = vsel %vm421, %v1502, %v1500
    %v1553 = vsel %vm421, %v1506, %v1504
    %v1557 = vsel %vm421, %v1510, %v1508
    %v1561 = vsel %vm421, %v1514, %v1512
    %v1565 = vsel %vm421, %v1518, %v1516
    %v1569 = vsel %vm421, %v1522, %v1520
    %v1573 = vsel %vm421, %v1526, %v1524
    %1575 = vrot.lane.b32.xlu0 %v1255, 126
    %v1576 = vpop.permute.xlu0 %1575
    %1577 = vrot.lane.b32.xlu0 %v1256, 126
    %v1578 = vpop.permute.xlu0 %1577
    %1579 = vrot.lane.b32.xlu0 %v1257, 126
    %v1580 = vpop.permute.xlu0 %1579
    %1581 = vrot.lane.b32.xlu0 %v1258, 126
    %v1582 = vpop.permute.xlu0 %1581
    %1583 = vrot.lane.b32.xlu0 %v1259, 126
    %v1584 = vpop.permute.xlu0 %1583
    %1585 = vrot.lane.b32.xlu0 %v1260, 126
    %v1586 = vpop.permute.xlu0 %1585
    %1587 = vrot.lane.b32.xlu0 %v1261, 126
    %v1588 = vpop.permute.xlu0 %1587
    %1589 = vrot.lane.b32.xlu0 %v1262, 126
    %v1590 = vpop.permute.xlu0 %1589
    %1591 = vrot.lane.b32.xlu0 %v1263, 126
    %v1592 = vpop.permute.xlu0 %1591
    %1593 = vrot.lane.b32.xlu0 %v1264, 126
    %v1594 = vpop.permute.xlu0 %1593
    %1595 = vrot.lane.b32.xlu0 %v1265, 126
    %v1596 = vpop.permute.xlu0 %1595
    %1597 = vrot.lane.b32.xlu0 %v1266, 126
    %v1598 = vpop.permute.xlu0 %1597
    %1599 = vrot.lane.b32.xlu0 %v1267, 126
    %v1600 = vpop.permute.xlu0 %1599
    %1601 = vrot.lane.b32.xlu0 %v1268, 126
    %v1602 = vpop.permute.xlu0 %1601
    %1603 = vrot.lane.b32.xlu0 %v1269, 126
    %v1604 = vpop.permute.xlu0 %1603
    %1605 = vrot.lane.b32.xlu0 %v1270, 126
    %v1606 = vpop.permute.xlu0 %1605
    %v1607 = vsel %vm486, %v1576, %v1578
    %v1608 = vsel %vm486, %v1580, %v1582
    %v1609 = vsel %vm486, %v1584, %v1586
    %v1610 = vsel %vm486, %v1588, %v1590
    %v1611 = vsel %vm486, %v1592, %v1594
    %v1612 = vsel %vm486, %v1596, %v1598
    %v1613 = vsel %vm486, %v1600, %v1602
    %v1614 = vsel %vm486, %v1604, %v1606
    %v1625 = vsel %vm503, %v1578, %v1576
    %v1629 = vsel %vm503, %v1582, %v1580
    %v1633 = vsel %vm503, %v1586, %v1584
    %v1637 = vsel %vm503, %v1590, %v1588
    %v1641 = vsel %vm503, %v1594, %v1592
    %v1645 = vsel %vm503, %v1598, %v1596
    %v1649 = vsel %vm503, %v1602, %v1600
    %v1653 = vsel %vm503, %v1606, %v1604
    %v1655 = vld [vmem:[%s5] sm:$0xff]
    %v1656 = vld [vmem:[%s5 + $0x8] sm:$0xff]
    %v1657 = vld [vmem:[%s5 + $0x10] sm:$0xff]
    %v1658 = vld [vmem:[%s5 + $0x18] sm:$0xff]
    %v1659 = vld [vmem:[%s5 + $0x20] sm:$0xff]
    %v1660 = vld [vmem:[%s5 + $0x28] sm:$0xff]
    %v1661 = vld [vmem:[%s5 + $0x30] sm:$0xff]
    %v1662 = vld [vmem:[%s5 + $0x38] sm:$0xff]
    %v1663 = vld [vmem:[%s5 + $0x40] sm:$0xff]
    %v1664 = vld [vmem:[%s5 + $0x48] sm:$0xff]
    %v1665 = vld [vmem:[%s5 + $0x50] sm:$0xff]
    %v1666 = vld [vmem:[%s5 + $0x58] sm:$0xff]
    %v1667 = vld [vmem:[%s5 + $0x60] sm:$0xff]
    %v1668 = vld [vmem:[%s5 + $0x68] sm:$0xff]
    %v1669 = vld [vmem:[%s5 + $0x70] sm:$0xff]
    %v1670 = vld [vmem:[%s5 + $0x78] sm:$0xff]
    %1672 = vset.pattern.permute.xlu0 0
    %1673 = vperm.xlu0 %1672, %v1655
    %v1674 = vpop.permute.xlu0 %1673
    %1677 = vset.pattern.permute.xlu0 0
    %1678 = vperm.xlu0 %1677, %v1656
    %v1679 = vpop.permute.xlu0 %1678
    %1682 = vset.pattern.permute.xlu0 0
    %1683 = vperm.xlu0 %1682, %v1657
    %v1684 = vpop.permute.xlu0 %1683
    %1687 = vset.pattern.permute.xlu0 0
    %1688 = vperm.xlu0 %1687, %v1658
    %v1689 = vpop.permute.xlu0 %1688
    %1692 = vset.pattern.permute.xlu0 0
    %1693 = vperm.xlu0 %1692, %v1659
    %v1694 = vpop.permute.xlu0 %1693
    %1697 = vset.pattern.permute.xlu0 0
    %1698 = vperm.xlu0 %1697, %v1660
    %v1699 = vpop.permute.xlu0 %1698
    %1702 = vset.pattern.permute.xlu0 0
    %1703 = vperm.xlu0 %1702, %v1661
    %v1704 = vpop.permute.xlu0 %1703
    %1707 = vset.pattern.permute.xlu0 0
    %1708 = vperm.xlu0 %1707, %v1662
    %v1709 = vpop.permute.xlu0 %1708
    %1712 = vset.pattern.permute.xlu0 0
    %1713 = vperm.xlu0 %1712, %v1663
    %v1714 = vpop.permute.xlu0 %1713
    %1717 = vset.pattern.permute.xlu0 0
    %1718 = vperm.xlu0 %1717, %v1664
    %v1719 = vpop.permute.xlu0 %1718
    %1722 = vset.pattern.permute.xlu0 0
    %1723 = vperm.xlu0 %1722, %v1665
    %v1724 = vpop.permute.xlu0 %1723
    %1727 = vset.pattern.permute.xlu0 0
    %1728 = vperm.xlu0 %1727, %v1666
    %v1729 = vpop.permute.xlu0 %1728
    %1732 = vset.pattern.permute.xlu0 0
    %1733 = vperm.xlu0 %1732, %v1667
    %v1734 = vpop.permute.xlu0 %1733
    %1737 = vset.pattern.permute.xlu0 0
    %1738 = vperm.xlu0 %1737, %v1668
    %v1739 = vpop.permute.xlu0 %1738
    %1742 = vset.pattern.permute.xlu0 0
    %1743 = vperm.xlu0 %1742, %v1669
    %v1744 = vpop.permute.xlu0 %1743
    %1747 = vset.pattern.permute.xlu0 0
    %1748 = vperm.xlu0 %1747, %v1670
    %v1749 = vpop.permute.xlu0 %1748
    %v1799 = vunpack.c.l.b16 %v1271
    %v1800 = vunpack.c.h.b16 %v1271
    %v1801 = vunpack.c.l.b16 %v1272
    %v1802 = vunpack.c.h.b16 %v1272
    %v1803 = vunpack.c.l.b16 %v1273
    %v1804 = vunpack.c.l.b16 %v1274
    %v1805 = vunpack.c.h.b16 %v1274
    %v1806 = vunpack.c.l.b16 %v1275
    %v1807 = vunpack.c.h.b16 %v1275
    %v1808 = vunpack.c.l.b16 %v1276
    %v1809 = vunpack.c.l.b16 %v1277
    %v1810 = vunpack.c.h.b16 %v1277
    %v1811 = vunpack.c.l.b16 %v1278
    %v1812 = vunpack.c.h.b16 %v1278
    %v1813 = vunpack.c.l.b16 %v1279
    %v1814 = vunpack.c.l.b16 %v1280
    %v1815 = vunpack.c.h.b16 %v1280
    %v1816 = vunpack.c.l.b16 %v1281
    %v1817 = vunpack.c.h.b16 %v1281
    %v1818 = vunpack.c.l.b16 %v1282
    %v1819 = vunpack.c.l.b16 %v1283
    %v1820 = vunpack.c.h.b16 %v1283
    %v1821 = vunpack.c.l.b16 %v1284
    %v1822 = vunpack.c.h.b16 %v1284
    %v1823 = vunpack.c.l.b16 %v1285
    %v1824 = vunpack.c.l.b16 %v1286
    %v1825 = vunpack.c.h.b16 %v1286
    %v1826 = vunpack.c.l.b16 %v1287
    %v1827 = vunpack.c.h.b16 %v1287
    %v1828 = vunpack.c.l.b16 %v1288
    %v1829 = vunpack.c.l.b16 %v1289
    %v1830 = vunpack.c.h.b16 %v1289
    %v1831 = vunpack.c.l.b16 %v1290
    %v1832 = vunpack.c.h.b16 %v1290
    %v1833 = vunpack.c.l.b16 %v1291
    %v1834 = vunpack.c.l.b16 %v1292
    %v1835 = vunpack.c.h.b16 %v1292
    %v1836 = vunpack.c.l.b16 %v1293
    %v1837 = vunpack.c.h.b16 %v1293
    %v1838 = vunpack.c.l.b16 %v1294
    %v1839 = vunpack.c.l.b16 %v1295
    %v1840 = vunpack.c.h.b16 %v1295
    %v1841 = vunpack.c.l.b16 %v1296
    %v1842 = vunpack.c.h.b16 %v1296
    %v1843 = vunpack.c.l.b16 %v1297
    %v1844 = vunpack.c.l.b16 %v1298
    %v1845 = vunpack.c.h.b16 %v1298
    %v1846 = vunpack.c.l.b16 %v1299
    %v1847 = vunpack.c.h.b16 %v1299
    %v1848 = vunpack.c.l.b16 %v1300
    %v1849 = vunpack.c.l.b16 %v1301
    %v1850 = vunpack.c.h.b16 %v1301
    %v1851 = vunpack.c.l.b16 %v1302
    %v1852 = vunpack.c.h.b16 %v1302
    %v1853 = vunpack.c.l.b16 %v1303
    %v1854 = vunpack.c.l.b16 %v1304
    %v1855 = vunpack.c.h.b16 %v1304
    %v1856 = vunpack.c.l.b16 %v1305
    %v1857 = vunpack.c.h.b16 %v1305
    %v1858 = vunpack.c.l.b16 %v1306
    %v1859 = vunpack.c.l.b16 %v1307
    %v1860 = vunpack.c.h.b16 %v1307
    %v1861 = vunpack.c.l.b16 %v1308
    %v1862 = vunpack.c.h.b16 %v1308
    %v1863 = vunpack.c.l.b16 %v1309
    %v1864 = vunpack.c.l.b16 %v1310
    %v1865 = vunpack.c.h.b16 %v1310
    %v1866 = vunpack.c.l.b16 %v1311
    %v1867 = vunpack.c.h.b16 %v1311
    %v1868 = vunpack.c.l.b16 %v1312
    %v1869 = vunpack.c.l.b16 %v1313
    %v1870 = vunpack.c.h.b16 %v1313
    %v1871 = vunpack.c.l.b16 %v1314
    %v1872 = vunpack.c.h.b16 %v1314
    %v1873 = vunpack.c.l.b16 %v1315
    %v1874 = vunpack.c.l.b16 %v1316
    %v1875 = vunpack.c.h.b16 %v1316
    %v1876 = vunpack.c.l.b16 %v1317
    %v1877 = vunpack.c.h.b16 %v1317
    %v1878 = vunpack.c.l.b16 %v1318
    %v1879 = vpack.c.b16 %v1804, %v1799
    %v1880 = vpack.c.b16 %v1805, %v1800
    %v1881 = vpack.c.b16 %v1806, %v1801
    %v1882 = vpack.c.b16 %v1807, %v1802
    %v1883 = vpack.c.b16 %v1808, %v1803
    %v1884 = vpack.c.b16 %v1814, %v1809
    %v1885 = vpack.c.b16 %v1815, %v1810
    %v1886 = vpack.c.b16 %v1816, %v1811
    %v1887 = vpack.c.b16 %v1817, %v1812
    %v1888 = vpack.c.b16 %v1818, %v1813
    %v1889 = vpack.c.b16 %v1824, %v1819
    %v1890 = vpack.c.b16 %v1825, %v1820
    %v1891 = vpack.c.b16 %v1826, %v1821
    %v1892 = vpack.c.b16 %v1827, %v1822
    %v1893 = vpack.c.b16 %v1828, %v1823
    %v1894 = vpack.c.b16 %v1834, %v1829
    %v1895 = vpack.c.b16 %v1835, %v1830
    %v1896 = vpack.c.b16 %v1836, %v1831
    %v1897 = vpack.c.b16 %v1837, %v1832
    %v1898 = vpack.c.b16 %v1838, %v1833
    %v1899 = vpack.c.b16 %v1844, %v1839
    %v1900 = vpack.c.b16 %v1845, %v1840
    %v1901 = vpack.c.b16 %v1846, %v1841
    %v1902 = vpack.c.b16 %v1847, %v1842
    %v1903 = vpack.c.b16 %v1848, %v1843
    %v1904 = vpack.c.b16 %v1854, %v1849
    %v1905 = vpack.c.b16 %v1855, %v1850
    %v1906 = vpack.c.b16 %v1856, %v1851
    %v1907 = vpack.c.b16 %v1857, %v1852
    %v1908 = vpack.c.b16 %v1858, %v1853
    %v1909 = vpack.c.b16 %v1864, %v1859
    %v1910 = vpack.c.b16 %v1865, %v1860
    %v1911 = vpack.c.b16 %v1866, %v1861
    %v1912 = vpack.c.b16 %v1867, %v1862
    %v1913 = vpack.c.b16 %v1868, %v1863
    %v1914 = vpack.c.b16 %v1874, %v1869
    %v1915 = vpack.c.b16 %v1875, %v1870
    %v1916 = vpack.c.b16 %v1876, %v1871
    %v1917 = vpack.c.b16 %v1877, %v1872
    %v1918 = vpack.c.b16 %v1878, %v1873
    %1959 = vmatprep.subr.bf16.mxu0 %v1374
    %1960 = vmatpush1.bf16.msra.mxu0 %v1413
    %1961 = vmatprep.subr.bf16.mxu0 %v1373
    %1962 = vmatpush1.bf16.msra.mxu0 %v1409
    %1963 = vmatprep.subr.bf16.mxu0 %v1372
    %1964 = vmatpush1.bf16.msra.mxu0 %v1405
    %1965 = vmatprep.subr.bf16.mxu0 %v1371
    %1966 = vmatpush1.bf16.msra.mxu0 %v1401
    %1967 = vmatprep.subr.bf16.mxu0 %v1370
    %1968 = vmatpush1.bf16.msra.mxu0 %v1397
    %1969 = vmatprep.subr.bf16.mxu0 %v1369
    %1970 = vmatpush1.bf16.msra.mxu0 %v1393
    %1971 = vmatprep.subr.bf16.mxu0 %v1368
    %1972 = vmatpush1.bf16.msra.mxu0 %v1389
    %1973 = vmatprep.subr.bf16.mxu0 %v1367
    %1974 = vmatpush1.bf16.msra.mxu0 %v1385
    %1975 = vmatprep.subr.bf16.mxu0 %v1454
    %1976 = vmatpush2.bf16.msra.mxu0 %v1493
    %1977 = vmatprep.subr.bf16.mxu0 %v1453
    %1978 = vmatpush2.bf16.msra.mxu0 %v1489
    %1979 = vmatprep.subr.bf16.mxu0 %v1452
    %1980 = vmatpush2.bf16.msra.mxu0 %v1485
    %1981 = vmatprep.subr.bf16.mxu0 %v1451
    %1982 = vmatpush2.bf16.msra.mxu0 %v1481
    %1983 = vmatprep.subr.bf16.mxu0 %v1450
    %1984 = vmatpush2.bf16.msra.mxu0 %v1477
    %1985 = vmatprep.subr.bf16.mxu0 %v1449
    %1986 = vmatpush2.bf16.msra.mxu0 %v1473
    %1987 = vmatprep.subr.bf16.mxu0 %v1448
    %1988 = vmatpush2.bf16.msra.mxu0 %v1469
    %1989 = vmatprep.subr.bf16.mxu0 %v1447
    %1990 = vmatpush2.bf16.msra.mxu0 %v1465
    %1991 = vmatprep.mubr.bf16.mxu0 %v1880
    %1992 = vmatmul.mubr.bf16.gmra.mxu0 %v1879
    %v1993 = vpop.f32.mrf.mxu0
    %v1994 = vadd.f32 %v1674, %v1993
    %v1995 = vpop.f32.mrf.mxu0
    %v1996 = vadd.f32 %v1674, %v1995
    %v1997 = vpop.f32.mrf.mxu0
    %v1998 = vadd.f32 %v1679, %v1997
    %v1999 = vpop.f32.mrf.mxu0
    %v2000 = vadd.f32 %v1679, %v1999
    %2001 = vmatprep.mubr.bf16.mxu0 %v1885
    %2002 = vmatmul.mubr.bf16.gmra.mxu0 %v1884
    %v2003 = vpop.f32.mrf.mxu0
    %v2004 = vadd.f32 %v1684, %v2003
    %v2005 = vpop.f32.mrf.mxu0
    %v2006 = vadd.f32 %v1684, %v2005
    %v2007 = vpop.f32.mrf.mxu0
    %v2008 = vadd.f32 %v1689, %v2007
    %v2009 = vpop.f32.mrf.mxu0
    %v2010 = vadd.f32 %v1689, %v2009
    %2011 = vmatprep.mubr.bf16.mxu0 %v1890
    %2012 = vmatmul.mubr.bf16.gmra.mxu0 %v1889
    %v2013 = vpop.f32.mrf.mxu0
    %v2014 = vadd.f32 %v1694, %v2013
    %v2015 = vpop.f32.mrf.mxu0
    %v2016 = vadd.f32 %v1694, %v2015
    %v2017 = vpop.f32.mrf.mxu0
    %v2018 = vadd.f32 %v1699, %v2017
    %v2019 = vpop.f32.mrf.mxu0
    %v2020 = vadd.f32 %v1699, %v2019
    %2021 = vmatprep.mubr.bf16.mxu0 %v1895
    %2022 = vmatmul.mubr.bf16.gmra.mxu0 %v1894
    %v2023 = vpop.f32.mrf.mxu0
    %v2024 = vadd.f32 %v1704, %v2023
    %v2025 = vpop.f32.mrf.mxu0
    %v2026 = vadd.f32 %v1704, %v2025
    %v2027 = vpop.f32.mrf.mxu0
    %v2028 = vadd.f32 %v1709, %v2027
    %v2029 = vpop.f32.mrf.mxu0
    %v2030 = vadd.f32 %v1709, %v2029
    %2031 = vmatprep.mubr.bf16.mxu0 %v1900
    %2032 = vmatmul.mubr.bf16.gmra.mxu0 %v1899
    %v2033 = vpop.f32.mrf.mxu0
    %v2034 = vadd.f32 %v1714, %v2033
    %v2035 = vpop.f32.mrf.mxu0
    %v2036 = vadd.f32 %v1714, %v2035
    %v2037 = vpop.f32.mrf.mxu0
    %v2038 = vadd.f32 %v1719, %v2037
    %v2039 = vpop.f32.mrf.mxu0
    %v2040 = vadd.f32 %v1719, %v2039
    %2041 = vmatprep.mubr.bf16.mxu0 %v1905
    %2042 = vmatmul.mubr.bf16.gmra.mxu0 %v1904
    %v2043 = vpop.f32.mrf.mxu0
    %v2044 = vadd.f32 %v1724, %v2043
    %v2045 = vpop.f32.mrf.mxu0
    %v2046 = vadd.f32 %v1724, %v2045
    %v2047 = vpop.f32.mrf.mxu0
    %v2048 = vadd.f32 %v1729, %v2047
    %v2049 = vpop.f32.mrf.mxu0
    %v2050 = vadd.f32 %v1729, %v2049
    %2051 = vmatprep.mubr.bf16.mxu0 %v1910
    %2052 = vmatmul.mubr.bf16.gmra.mxu0 %v1909
    %v2053 = vpop.f32.mrf.mxu0
    %v2054 = vadd.f32 %v1734, %v2053
    %v2055 = vpop.f32.mrf.mxu0
    %v2056 = vadd.f32 %v1734, %v2055
    %v2057 = vpop.f32.mrf.mxu0
    %v2058 = vadd.f32 %v1739, %v2057
    %v2059 = vpop.f32.mrf.mxu0
    %v2060 = vadd.f32 %v1739, %v2059
    %2061 = vmatprep.mubr.bf16.mxu0 %v1915
    %2062 = vmatmul.mubr.bf16.gmra.mxu0 %v1914
    %v2063 = vpop.f32.mrf.mxu0
    %v2064 = vadd.f32 %v1744, %v2063
    %v2065 = vpop.f32.mrf.mxu0
    %v2066 = vadd.f32 %v1744, %v2065
    %v2067 = vpop.f32.mrf.mxu0
    %v2068 = vadd.f32 %v1749, %v2067
    %v2069 = vpop.f32.mrf.mxu0
    %v2070 = vadd.f32 %v1749, %v2069
    %2071 = vdwg.mxu0
    %2072 = vmatprep.subr.bf16.mxu0 %v1270
    %2073 = vmatpush1.bf16.msra.mxu0 %v1269
    %2074 = vmatprep.subr.bf16.mxu0 %v1268
    %2075 = vmatpush1.bf16.msra.mxu0 %v1267
    %2076 = vmatprep.subr.bf16.mxu0 %v1266
    %2077 = vmatpush1.bf16.msra.mxu0 %v1265
    %2078 = vmatprep.subr.bf16.mxu0 %v1264
    %2079 = vmatpush1.bf16.msra.mxu0 %v1263
    %2080 = vmatprep.subr.bf16.mxu0 %v1262
    %2081 = vmatpush1.bf16.msra.mxu0 %v1261
    %2082 = vmatprep.subr.bf16.mxu0 %v1260
    %2083 = vmatpush1.bf16.msra.mxu0 %v1259
    %2084 = vmatprep.subr.bf16.mxu0 %v1258
    %2085 = vmatpush1.bf16.msra.mxu0 %v1257
    %2086 = vmatprep.subr.bf16.mxu0 %v1256
    %2087 = vmatpush1.bf16.msra.mxu0 %v1255
    %2088 = vmatprep.subr.bf16.mxu0 %v1573
    %2089 = vmatpush2.bf16.msra.mxu0 %v1534
    %2090 = vmatprep.subr.bf16.mxu0 %v1569
    %2091 = vmatpush2.bf16.msra.mxu0 %v1533
    %2092 = vmatprep.subr.bf16.mxu0 %v1565
    %2093 = vmatpush2.bf16.msra.mxu0 %v1532
    %2094 = vmatprep.subr.bf16.mxu0 %v1561
    %2095 = vmatpush2.bf16.msra.mxu0 %v1531
    %2096 = vmatprep.subr.bf16.mxu0 %v1557
    %2097 = vmatpush2.bf16.msra.mxu0 %v1530
    %2098 = vmatprep.subr.bf16.mxu0 %v1553
    %2099 = vmatpush2.bf16.msra.mxu0 %v1529
    %2100 = vmatprep.subr.bf16.mxu0 %v1549
    %2101 = vmatpush2.bf16.msra.mxu0 %v1528
    %2102 = vmatprep.subr.bf16.mxu0 %v1545
    %2103 = vmatpush2.bf16.msra.mxu0 %v1527
    %2104 = vmatprep.mubr.bf16.mxu0 %v1882
    %2105 = vmatmul.mubr.bf16.gmra.mxu0 %v1881
    %v2106 = vpop.f32.mrf.mxu0
    %v2107 = vadd.f32 %v1994, %v2106
    %v2108 = vpop.f32.mrf.mxu0
    %v2109 = vadd.f32 %v1996, %v2108
    %v2110 = vpop.f32.mrf.mxu0
    %v2111 = vadd.f32 %v1998, %v2110
    %v2112 = vpop.f32.mrf.mxu0
    %v2113 = vadd.f32 %v2000, %v2112
    %2114 = vmatprep.mubr.bf16.mxu0 %v1887
    %2115 = vmatmul.mubr.bf16.gmra.mxu0 %v1886
    %v2116 = vpop.f32.mrf.mxu0
    %v2117 = vadd.f32 %v2004, %v2116
    %v2118 = vpop.f32.mrf.mxu0
    %v2119 = vadd.f32 %v2006, %v2118
    %v2120 = vpop.f32.mrf.mxu0
    %v2121 = vadd.f32 %v2008, %v2120
    %v2122 = vpop.f32.mrf.mxu0
    %v2123 = vadd.f32 %v2010, %v2122
    %2124 = vmatprep.mubr.bf16.mxu0 %v1892
    %2125 = vmatmul.mubr.bf16.gmra.mxu0 %v1891
    %v2126 = vpop.f32.mrf.mxu0
    %v2127 = vadd.f32 %v2014, %v2126
    %v2128 = vpop.f32.mrf.mxu0
    %v2129 = vadd.f32 %v2016, %v2128
    %v2130 = vpop.f32.mrf.mxu0
    %v2131 = vadd.f32 %v2018, %v2130
    %v2132 = vpop.f32.mrf.mxu0
    %v2133 = vadd.f32 %v2020, %v2132
    %2134 = vmatprep.mubr.bf16.mxu0 %v1897
    %2135 = vmatmul.mubr.bf16.gmra.mxu0 %v1896
    %v2136 = vpop.f32.mrf.mxu0
    %v2137 = vadd.f32 %v2024, %v2136
    %v2138 = vpop.f32.mrf.mxu0
    %v2139 = vadd.f32 %v2026, %v2138
    %v2140 = vpop.f32.mrf.mxu0
    %v2141 = vadd.f32 %v2028, %v2140
    %v2142 = vpop.f32.mrf.mxu0
    %v2143 = vadd.f32 %v2030, %v2142
    %2144 = vmatprep.mubr.bf16.mxu0 %v1902
    %2145 = vmatmul.mubr.bf16.gmra.mxu0 %v1901
    %v2146 = vpop.f32.mrf.mxu0
    %v2147 = vadd.f32 %v2034, %v2146
    %v2148 = vpop.f32.mrf.mxu0
    %v2149 = vadd.f32 %v2036, %v2148
    %v2150 = vpop.f32.mrf.mxu0
    %v2151 = vadd.f32 %v2038, %v2150
    %v2152 = vpop.f32.mrf.mxu0
    %v2153 = vadd.f32 %v2040, %v2152
    %2154 = vmatprep.mubr.bf16.mxu0 %v1907
    %2155 = vmatmul.mubr.bf16.gmra.mxu0 %v1906
    %v2156 = vpop.f32.mrf.mxu0
    %v2157 = vadd.f32 %v2044, %v2156
    %v2158 = vpop.f32.mrf.mxu0
    %v2159 = vadd.f32 %v2046, %v2158
    %v2160 = vpop.f32.mrf.mxu0
    %v2161 = vadd.f32 %v2048, %v2160
    %v2162 = vpop.f32.mrf.mxu0
    %v2163 = vadd.f32 %v2050, %v2162
    %2164 = vmatprep.mubr.bf16.mxu0 %v1912
    %2165 = vmatmul.mubr.bf16.gmra.mxu0 %v1911
    %v2166 = vpop.f32.mrf.mxu0
    %v2167 = vadd.f32 %v2054, %v2166
    %v2168 = vpop.f32.mrf.mxu0
    %v2169 = vadd.f32 %v2056, %v2168
    %v2170 = vpop.f32.mrf.mxu0
    %v2171 = vadd.f32 %v2058, %v2170
    %v2172 = vpop.f32.mrf.mxu0
    %v2173 = vadd.f32 %v2060, %v2172
    %2174 = vmatprep.mubr.bf16.mxu0 %v1917
    %2175 = vmatmul.mubr.bf16.gmra.mxu0 %v1916
    %v2176 = vpop.f32.mrf.mxu0
    %v2177 = vadd.f32 %v2064, %v2176
    %v2178 = vpop.f32.mrf.mxu0
    %v2179 = vadd.f32 %v2066, %v2178
    %v2180 = vpop.f32.mrf.mxu0
    %v2181 = vadd.f32 %v2068, %v2180
    %v2182 = vpop.f32.mrf.mxu0
    %v2183 = vadd.f32 %v2070, %v2182
    %2184 = vdwg.mxu0
    %2185 = vmatprep.subr.bf16.mxu0 %v1653
    %2186 = vmatpush1.bf16.msra.mxu0 %v1614
    %2187 = vmatprep.subr.bf16.mxu0 %v1649
    %2188 = vmatpush1.bf16.msra.mxu0 %v1613
    %2189 = vmatprep.subr.bf16.mxu0 %v1645
    %2190 = vmatpush1.bf16.msra.mxu0 %v1612
    %2191 = vmatprep.subr.bf16.mxu0 %v1641
    %2192 = vmatpush1.bf16.msra.mxu0 %v1611
    %2193 = vmatprep.subr.bf16.mxu0 %v1637
    %2194 = vmatpush1.bf16.msra.mxu0 %v1610
    %2195 = vmatprep.subr.bf16.mxu0 %v1633
    %2196 = vmatpush1.bf16.msra.mxu0 %v1609
    %2197 = vmatprep.subr.bf16.mxu0 %v1629
    %2198 = vmatpush1.bf16.msra.mxu0 %v1608
    %2199 = vmatprep.subr.bf16.mxu0 %v1625
    %2200 = vmatpush1.bf16.msra.mxu0 %v1607
    %2201 = vmatprep.subr.bf16.mxu0 0
    %2202 = vmatpush2.bf16.msra.mxu0 0
    %2203 = vmatprep.subr.bf16.mxu0 0
    %2204 = vmatpush2.bf16.msra.mxu0 0
    %2205 = vmatprep.subr.bf16.mxu0 0
    %2206 = vmatpush2.bf16.msra.mxu0 0
    %2207 = vmatprep.subr.bf16.mxu0 0
    %2208 = vmatpush2.bf16.msra.mxu0 0
    %2209 = vmatprep.subr.bf16.mxu0 0
    %2210 = vmatpush2.bf16.msra.mxu0 0
    %2211 = vmatprep.subr.bf16.mxu0 0
    %2212 = vmatpush2.bf16.msra.mxu0 0
    %2213 = vmatprep.subr.bf16.mxu0 0
    %2214 = vmatpush2.bf16.msra.mxu0 0
    %2215 = vmatprep.subr.bf16.mxu0 0
    %2216 = vmatpush2.bf16.msra.mxu0 0
    %2217 = vmatprep.mubr.bf16.mxu0 0
    %2218 = vmatmul.mubr.bf16.gmra.mxu0 %v1883
    %v2219 = vpop.f32.mrf.mxu0
    %v2220 = vadd.f32 %v2107, %v2219
    %v2221 = vpop.f32.mrf.mxu0
    %v2222 = vadd.f32 %v2109, %v2221
    %v2223 = vpop.f32.mrf.mxu0
    %v2224 = vadd.f32 %v2111, %v2223
    %v2225 = vpop.f32.mrf.mxu0
    %v2226 = vadd.f32 %v2113, %v2225
    %2227 = vmatprep.mubr.bf16.mxu0 0
    %2228 = vmatmul.mubr.bf16.gmra.mxu0 %v1888
    %v2229 = vpop.f32.mrf.mxu0
    %v2230 = vadd.f32 %v2117, %v2229
    %v2231 = vpop.f32.mrf.mxu0
    %v2232 = vadd.f32 %v2119, %v2231
    %v2233 = vpop.f32.mrf.mxu0
    %v2234 = vadd.f32 %v2121, %v2233
    %v2235 = vpop.f32.mrf.mxu0
    %v2236 = vadd.f32 %v2123, %v2235
    %2237 = vmatprep.mubr.bf16.mxu0 0
    %2238 = vmatmul.mubr.bf16.gmra.mxu0 %v1893
    %v2239 = vpop.f32.mrf.mxu0
    %v2240 = vadd.f32 %v2127, %v2239
    %v2241 = vpop.f32.mrf.mxu0
    %v2242 = vadd.f32 %v2129, %v2241
    %v2243 = vpop.f32.mrf.mxu0
    %v2244 = vadd.f32 %v2131, %v2243
    %v2245 = vpop.f32.mrf.mxu0
    %v2246 = vadd.f32 %v2133, %v2245
    %2247 = vmatprep.mubr.bf16.mxu0 0
    %2248 = vmatmul.mubr.bf16.gmra.mxu0 %v1898
    %v2249 = vpop.f32.mrf.mxu0
    %v2250 = vadd.f32 %v2137, %v2249
    %v2251 = vpop.f32.mrf.mxu0
    %v2252 = vadd.f32 %v2139, %v2251
    %v2253 = vpop.f32.mrf.mxu0
    %v2254 = vadd.f32 %v2141, %v2253
    %v2255 = vpop.f32.mrf.mxu0
    %v2256 = vadd.f32 %v2143, %v2255
    %2257 = vmatprep.mubr.bf16.mxu0 0
    %2258 = vmatmul.mubr.bf16.gmra.mxu0 %v1903
    %v2259 = vpop.f32.mrf.mxu0
    %v2260 = vadd.f32 %v2147, %v2259
    %v2261 = vpop.f32.mrf.mxu0
    %v2262 = vadd.f32 %v2149, %v2261
    %v2263 = vpop.f32.mrf.mxu0
    %v2264 = vadd.f32 %v2151, %v2263
    %v2265 = vpop.f32.mrf.mxu0
    %v2266 = vadd.f32 %v2153, %v2265
    %2267 = vmatprep.mubr.bf16.mxu0 0
    %2268 = vmatmul.mubr.bf16.gmra.mxu0 %v1908
    %v2269 = vpop.f32.mrf.mxu0
    %v2270 = vadd.f32 %v2157, %v2269
    %v2271 = vpop.f32.mrf.mxu0
    %v2272 = vadd.f32 %v2159, %v2271
    %v2273 = vpop.f32.mrf.mxu0
    %v2274 = vadd.f32 %v2161, %v2273
    %v2275 = vpop.f32.mrf.mxu0
    %v2276 = vadd.f32 %v2163, %v2275
    %2277 = vmatprep.mubr.bf16.mxu0 0
    %2278 = vmatmul.mubr.bf16.gmra.mxu0 %v1913
    %v2279 = vpop.f32.mrf.mxu0
    %v2280 = vadd.f32 %v2167, %v2279
    %v2281 = vpop.f32.mrf.mxu0
    %v2282 = vadd.f32 %v2169, %v2281
    %v2283 = vpop.f32.mrf.mxu0
    %v2284 = vadd.f32 %v2171, %v2283
    %v2285 = vpop.f32.mrf.mxu0
    %v2286 = vadd.f32 %v2173, %v2285
    %2287 = vmatprep.mubr.bf16.mxu0 0
    %2288 = vmatmul.mubr.bf16.gmra.mxu0 %v1918
    %v2289 = vpop.f32.mrf.mxu0
    %v2290 = vadd.f32 %v2177, %v2289
    %v2291 = vpop.f32.mrf.mxu0
    %v2292 = vadd.f32 %v2179, %v2291
    %v2293 = vpop.f32.mrf.mxu0
    %v2294 = vadd.f32 %v2181, %v2293
    %v2295 = vpop.f32.mrf.mxu0
    %v2296 = vadd.f32 %v2183, %v2295
    %2297 = vdwg.mxu0
    %v2298 = vmul.f32 %v2220, 0.3
    %v2299 = vmul.f32 %v2222, 0.3
    %v2300 = vmul.f32 %v2224, 0.3
    %v2301 = vmul.f32 %v2226, 0.3
    %v2302 = vmul.f32 %v2230, 0.3
    %v2303 = vmul.f32 %v2232, 0.3
    %v2304 = vmul.f32 %v2234, 0.3
    %v2305 = vmul.f32 %v2236, 0.3
    %v2306 = vmul.f32 %v2240, 0.3
    %v2307 = vmul.f32 %v2242, 0.3
    %v2308 = vmul.f32 %v2244, 0.3
    %v2309 = vmul.f32 %v2246, 0.3
    %v2310 = vmul.f32 %v2250, 0.3
    %v2311 = vmul.f32 %v2252, 0.3
    %v2312 = vmul.f32 %v2254, 0.3
    %v2313 = vmul.f32 %v2256, 0.3
    %v2314 = vmul.f32 %v2260, 0.3
    %v2315 = vmul.f32 %v2262, 0.3
    %v2316 = vmul.f32 %v2264, 0.3
    %v2317 = vmul.f32 %v2266, 0.3
    %v2318 = vmul.f32 %v2270, 0.3
    %v2319 = vmul.f32 %v2272, 0.3
    %v2320 = vmul.f32 %v2274, 0.3
    %v2321 = vmul.f32 %v2276, 0.3
    %v2322 = vmul.f32 %v2280, 0.3
    %v2323 = vmul.f32 %v2282, 0.3
    %v2324 = vmul.f32 %v2284, 0.3
    %v2325 = vmul.f32 %v2286, 0.3
    %v2326 = vmul.f32 %v2290, 0.3
    %v2327 = vmul.f32 %v2292, 0.3
    %v2328 = vmul.f32 %v2294, 0.3
    %v2329 = vmul.f32 %v2296, 0.3
    %v2330 = vadd.f32 %v64, %v2298
    %v2331 = vadd.f32 %v65, %v2299
    %v2332 = vadd.f32 %v66, %v2300
    %v2333 = vadd.f32 %v67, %v2301
    %v2334 = vadd.f32 %v68, %v2302
    %v2335 = vadd.f32 %v69, %v2303
    %v2336 = vadd.f32 %v70, %v2304
    %v2337 = vadd.f32 %v71, %v2305
    %v2338 = vadd.f32 %v72, %v2306
    %v2339 = vadd.f32 %v73, %v2307
    %v2340 = vadd.f32 %v74, %v2308
    %v2341 = vadd.f32 %v75, %v2309
    %v2342 = vadd.f32 %v76, %v2310
    %v2343 = vadd.f32 %v77, %v2311
    %v2344 = vadd.f32 %v78, %v2312
    %v2345 = vadd.f32 %v79, %v2313
    %v2346 = vadd.f32 %v80, %v2314
    %v2347 = vadd.f32 %v81, %v2315
    %v2348 = vadd.f32 %v82, %v2316
    %v2349 = vadd.f32 %v83, %v2317
    %v2350 = vadd.f32 %v84, %v2318
    %v2351 = vadd.f32 %v85, %v2319
    %v2352 = vadd.f32 %v86, %v2320
    %v2353 = vadd.f32 %v87, %v2321
    %v2354 = vadd.f32 %v88, %v2322
    %v2355 = vadd.f32 %v89, %v2323
    %v2356 = vadd.f32 %v90, %v2324
    %v2357 = vadd.f32 %v91, %v2325
    %v2358 = vadd.f32 %v92, %v2326
    %v2359 = vadd.f32 %v93, %v2327
    %v2360 = vadd.f32 %v94, %v2328
    %v2361 = vadd.f32 %v95, %v2329
    %2362 = vst [vmem:[#allocation8] sm:$0xff] %v2330
    %2363 = vst [vmem:[#allocation8 + $0x8] sm:$0xff] %v2331
    %2364 = vst [vmem:[#allocation8 + $0x10] sm:$0xff] %v2332
    %2365 = vst [vmem:[#allocation8 + $0x18] sm:$0xff] %v2333
    %2366 = vst [vmem:[#allocation8 + $0x20] sm:$0xff] %v2334
    %2367 = vst [vmem:[#allocation8 + $0x28] sm:$0xff] %v2335
    %2368 = vst [vmem:[#allocation8 + $0x30] sm:$0xff] %v2336
    %2369 = vst [vmem:[#allocation8 + $0x38] sm:$0xff] %v2337
    %2370 = vst [vmem:[#allocation8 + $0x40] sm:$0xff] %v2338
    %2371 = vst [vmem:[#allocation8 + $0x48] sm:$0xff] %v2339
    %2372 = vst [vmem:[#allocation8 + $0x50] sm:$0xff] %v2340
    %2373 = vst [vmem:[#allocation8 + $0x58] sm:$0xff] %v2341
    %2374 = vst [vmem:[#allocation8 + $0x60] sm:$0xff] %v2342
    %2375 = vst [vmem:[#allocation8 + $0x68] sm:$0xff] %v2343
    %2376 = vst [vmem:[#allocation8 + $0x70] sm:$0xff] %v2344
    %2377 = vst [vmem:[#allocation8 + $0x78] sm:$0xff] %v2345
    %2378 = vst [vmem:[#allocation8 + $0x80] sm:$0xff] %v2346
    %2379 = vst [vmem:[#allocation8 + $0x88] sm:$0xff] %v2347
    %2380 = vst [vmem:[#allocation8 + $0x90] sm:$0xff] %v2348
    %2381 = vst [vmem:[#allocation8 + $0x98] sm:$0xff] %v2349
    %2382 = vst [vmem:[#allocation8 + $0xa0] sm:$0xff] %v2350
    %2383 = vst [vmem:[#allocation8 + $0xa8] sm:$0xff] %v2351
    %2384 = vst [vmem:[#allocation8 + $0xb0] sm:$0xff] %v2352
    %2385 = vst [vmem:[#allocation8 + $0xb8] sm:$0xff] %v2353
    %2386 = vst [vmem:[#allocation8 + $0xc0] sm:$0xff] %v2354
    %2387 = vst [vmem:[#allocation8 + $0xc8] sm:$0xff] %v2355
    %2388 = vst [vmem:[#allocation8 + $0xd0] sm:$0xff] %v2356
    %2389 = vst [vmem:[#allocation8 + $0xd8] sm:$0xff] %v2357
    %2390 = vst [vmem:[#allocation8 + $0xe0] sm:$0xff] %v2358
    %2391 = vst [vmem:[#allocation8 + $0xe8] sm:$0xff] %v2359
    %2392 = vst [vmem:[#allocation8 + $0xf0] sm:$0xff] %v2360
    %2393 = vst [vmem:[#allocation8 + $0xf8] sm:$0xff] %v2361
    // Predicated region
    $region38: #{tpu_custom_call.1} parent=1 // pred_check
      _
    $region39: #{tpu_custom_call.1} parent=1 // pred_check_branch
      %2395 = sbr.rel (0) target = $region41
    $region40: #{tpu_custom_call.1} parent=1 // pred_region
      %s2397 = ssub.s32 4096, 4096
      %2398 = vsyncadd [#allocation4], %s2397
      %s2399 = sshll.u32 [#allocation8], 4
      %s2400 = int_to_ptr.vmem [resolvable:$true] %s2399
      %2405 = dma.vmem_to_hbm [thread:$0]  %s2400, 4096, %s6, [#allocation4], 256, 256, 16
    $region41: #{tpu_custom_call.1} parent=1 // pred_fallthru
      _
    // Predicated region
    $region42: #{tpu_custom_call.1} parent=1 // pred_check
      _
    $region43: #{tpu_custom_call.1} parent=1 // pred_check_branch
      %2407 = sbr.rel (0) target = $region45
    $region44: #{tpu_custom_call.1} parent=1 // pred_region
      %2408 = dma.done [#allocation4], 4096
    $region45: #{tpu_custom_call.1} parent=1 // pred_fallthru
      _
    %2409 = vsyncpa [#allocation3], 1
    %2410 = vsyncpa [#allocation6], 1
    %2411 = vsyncpa [#allocation4], 1

</llo_original>
